<compile_context>
chip_gen: v6e
topology: v6e:2x2x1
jax: 0.10.0
libtpu: 0.0.40
codegen_flags: <defaults>
</compile_context>

<pallas_src>
import math
import functools

import jax
import jax.numpy as jnp
from jax.experimental import pallas as pl
from jax.experimental.pallas import tpu as pltpu


def _block_self_attention_kernel(x_ref, pe_ref, wqkv_ref, bqkv_ref, wo_ref, aux_ref,
                                 out_ref, *, heads, head_dim, embed_dim, eps):
    H, Dh, E = heads, head_dim, embed_dim
    scale = 1.0 / math.sqrt(Dh)

    # Positional encoding (dropout p=0 -> identity).  One sample per grid step.
    xp = x_ref[...] + pe_ref[...]                                        # (S, E)

    # Fused Q/K/V projection: one (S,E)@(E,3E) matmul, then lane-slice.
    qkv = (jnp.dot(xp, wqkv_ref[...], preferred_element_type=jnp.float32)
           + bqkv_ref[...])                                              # (S, 3E)
    q = qkv[:, 0 * E:1 * E] * scale
    k = qkv[:, 1 * E:2 * E]
    v = qkv[:, 2 * E:3 * E]

    wo = wo_ref[...]                                                     # (E, E); rows = concat-head feats
    bo = aux_ref[0:1, :]
    gamma = aux_ref[1:2, :]
    beta = aux_ref[2:3, :]

    # Per-head attention (per-sample, so no mask needed).  Head outputs fold
    # straight into the output projection (no concatenate / scatter).
    attn = None
    for h in range(H):                        # H small & static -> unrolled
        lo = h * Dh
        qh = q[:, lo:lo + Dh]                 # (S, Dh)
        kh = k[:, lo:lo + Dh]
        vh = v[:, lo:lo + Dh]
        # q @ k^T contracting the head dim (no explicit transpose).
        s = jax.lax.dot_general(qh, kh, (((1,), (1,)), ((), ())),
                                preferred_element_type=jnp.float32)      # (S, S)
        s = s - jnp.max(s, axis=-1, keepdims=True)
        p = jnp.exp(s)
        p = p / jnp.sum(p, axis=-1, keepdims=True)   # exact divide (correctness)
        oh = jnp.dot(p, vh, preferred_element_type=jnp.float32)          # (S, Dh)
        contrib = jnp.dot(oh, wo[lo:lo + Dh, :],
                          preferred_element_type=jnp.float32)            # (S, E)
        attn = contrib if attn is None else attn + contrib
    attn = attn + bo

    # Residual + LayerNorm over the embedding dim.
    z = xp + attn
    mean = jnp.mean(z, axis=-1, keepdims=True)
    zc = z - mean
    var = jnp.mean(zc * zc, axis=-1, keepdims=True)
    inv = jax.lax.rsqrt(var + eps)
    out_ref[...] = (zc * inv * gamma + beta).astype(out_ref.dtype)


def sinusoidal_positional_encoding(seq_len, embed_dim):
    pos = jnp.arange(seq_len, dtype=jnp.float32)[:, None]                    # (S, 1)
    div = jnp.exp(jnp.arange(0, embed_dim, 2, dtype=jnp.float32)
                  * (-math.log(10000.0) / embed_dim))                        # (E/2,)
    pe = jnp.zeros((seq_len, embed_dim), jnp.float32)
    pe = pe.at[:, 0::2].set(jnp.sin(pos * div))
    pe = pe.at[:, 1::2].set(jnp.cos(pos * div))
    return pe


def block_self_attention(x_sbe, params, *, heads, eps=1e-5):
    """x_sbe: (S, B, E) float32 (seq, batch, embed).  Returns (S, B, E)."""
    S, B, E = x_sbe.shape
    H = heads
    Dh = E // H

    pe = sinusoidal_positional_encoding(S, E)                 # (S, E), shared over batch

    # Fused in_proj: PyTorch computes y = x @ W^T with W=(3E,E), so pre-transpose
    # once in the wrapper; column order of (E,3E) is [q | k | v].
    w_qkv = params["in_proj_weight"].T                        # (E, 3E)
    b_qkv = params["in_proj_bias"].reshape(1, 3 * E)          # (1, 3E)
    wo_t = params["out_proj_weight"].T                        # (E, E)
    # Pack the remaining per-feature vectors into a single operand.
    aux = jnp.stack([params["out_proj_bias"],
                     params["ln_weight"],
                     params["ln_bias"]], axis=0)              # (3, E)

    # Batch-major layout so each grid step gets a full (S, E) sample block.
    x_bse = jnp.transpose(x_sbe, (1, 0, 2))                   # (B, S, E)

    kernel = functools.partial(_block_self_attention_kernel,
                               heads=H, head_dim=Dh, embed_dim=E, eps=eps)

    out_bse = pl.pallas_call(
        kernel,
        out_shape=jax.ShapeDtypeStruct((B, S, E), jnp.float32),
        grid=(B,),
        in_specs=[
            pl.BlockSpec((None, S, E), lambda b: (b, 0, 0)),   # x: one sample per step
            pl.BlockSpec((S, E), lambda b: (0, 0)),            # pe: same block every step
            pl.BlockSpec((E, 3 * E), lambda b: (0, 0)),        # fused W_qkv
            pl.BlockSpec((1, 3 * E), lambda b: (0, 0)),        # fused b_qkv
            pl.BlockSpec((E, E), lambda b: (0, 0)),            # W_o^T
            pl.BlockSpec((3, E), lambda b: (0, 0)),            # [bo; gamma; beta]
        ],
        out_specs=pl.BlockSpec((None, S, E), lambda b: (b, 0, 0)),
        compiler_params=pltpu.CompilerParams(
            dimension_semantics=("parallel",)),                # shard batch across TCs on v7x
    )(x_bse, pe, w_qkv, b_qkv, wo_t, aux)

    return jnp.transpose(out_bse, (1, 0, 2))                   # back to (S, B, E)


def reference_block_self_attention(x_sbe, params, *, heads, eps=1e-5):
    """Pure-JAX reference with identical semantics (for validation)."""
    S, B, E = x_sbe.shape
    Dh = E // heads
    hp = jax.lax.Precision.HIGHEST
    pe = sinusoidal_positional_encoding(S, E)
    xp = x_sbe + pe[:, None, :]                                   # (S, B, E)

    qkv = jnp.einsum("sbe,fe->sbf", xp, params["in_proj_weight"], precision=hp) \
          + params["in_proj_bias"]                                # (S, B, 3E)
    q, k, v = jnp.split(qkv, 3, axis=-1)

    def split_heads(t):  # (S, B, E) -> (B, H, S, Dh)
        return jnp.transpose(t.reshape(S, B, heads, Dh), (1, 2, 0, 3))

    qh, kh, vh = split_heads(q), split_heads(k), split_heads(v)
    scores = jnp.einsum("bhsd,bhtd->bhst", qh, kh, precision=hp) / math.sqrt(Dh)
    p = jax.nn.softmax(scores, axis=-1)
    o = jnp.einsum("bhst,bhtd->bhsd", p, vh, precision=hp)         # (B, H, S, Dh)
    o = jnp.transpose(o, (2, 0, 1, 3)).reshape(S, B, E)
    attn = jnp.einsum("sbe,fe->sbf", o, params["out_proj_weight"], precision=hp) \
           + params["out_proj_bias"]

    z = xp + attn
    mean = jnp.mean(z, axis=-1, keepdims=True)
    var = jnp.mean((z - mean) ** 2, axis=-1, keepdims=True)
    return (z - mean) / jnp.sqrt(var + eps) * params["ln_weight"] + params["ln_bias"]


if __name__ == "__main__":
    # Small shapes consistent with the module: seq=8, batch=2, embed=32, heads=4.
    S, B, E, H = 8, 2, 32, 4

    key = jax.random.PRNGKey(0)
    kx, kw1, kb1, kw2, kb2, kg, kbt = jax.random.split(key, 7)

    x = jax.random.normal(kx, (S, B, E), jnp.float32)

    params = {
        "in_proj_weight": 0.1 * jax.random.normal(kw1, (3 * E, E), jnp.float32),
        "in_proj_bias":   0.1 * jax.random.normal(kb1, (3 * E,), jnp.float32),
        "out_proj_weight": 0.1 * jax.random.normal(kw2, (E, E), jnp.float32),
        "out_proj_bias":   0.1 * jax.random.normal(kb2, (E,), jnp.float32),
        "ln_weight": 1.0 + 0.05 * jax.random.normal(kg, (E,), jnp.float32),
        "ln_bias":   0.05 * jax.random.normal(kbt, (E,), jnp.float32),
    }

    out = block_self_attention(x, params, heads=H)
    out = jax.block_until_ready(out)

    ref = reference_block_self_attention(x, params, heads=H)
    assert out.shape == (S, B, E)
    # Softmax/LayerNorm math is exact f32; small slack covers MXU f32 pass
    # differences between Mosaic matmuls and the XLA reference on hardware.
    assert jnp.allclose(out, ref, atol=2e-3, rtol=2e-3), "mismatch vs reference"

    print("KERNEL_OK")
</pallas_src>

<mosaic_0001>
module attributes {stable_mosaic.version = 11 : i64} {
  func.func @_block_self_attention_kernel(%arg0: i32, %arg1: memref<1x8x32xf32, #tpu.memory_space<vmem>>, %arg2: memref<8x32xf32, #tpu.memory_space<vmem>>, %arg3: memref<32x96xf32, #tpu.memory_space<vmem>>, %arg4: memref<1x96xf32, #tpu.memory_space<vmem>>, %arg5: memref<32x32xf32, #tpu.memory_space<vmem>>, %arg6: memref<3x32xf32, #tpu.memory_space<vmem>>, %arg7: memref<1x8x32xf32, #tpu.memory_space<vmem>>) attributes {dimension_semantics = [#tpu.dimension_semantics<parallel>], iteration_bounds = array<i64: 2>, scalar_prefetch = 0 : i64, scratch_operands = 0 : i64, tpu.core_type = #tpu.core_type<tc>, window_params = [{transform_indices = @transform_0, window_bounds = array<i64: 1, 8, 32>}, {pipeline_mode = #tpu.pipeline_mode<synchronous>, transform_indices = @transform_1, window_bounds = array<i64: 8, 32>}, {pipeline_mode = #tpu.pipeline_mode<synchronous>, transform_indices = @transform_2, window_bounds = array<i64: 32, 96>}, {pipeline_mode = #tpu.pipeline_mode<synchronous>, transform_indices = @transform_3, window_bounds = array<i64: 1, 96>}, {pipeline_mode = #tpu.pipeline_mode<synchronous>, transform_indices = @transform_4, window_bounds = array<i64: 32, 32>}, {pipeline_mode = #tpu.pipeline_mode<synchronous>, transform_indices = @transform_5, window_bounds = array<i64: 3, 32>}, {transform_indices = @transform_6, window_bounds = array<i64: 1, 8, 32>}]} {
    %c0 = arith.constant 0 : index
    %c0_0 = arith.constant 0 : index
    %c0_1 = arith.constant 0 : index
    %0 = vector.load %arg1[%c0, %c0_0, %c0_1] : memref<1x8x32xf32, #tpu.memory_space<vmem>>, vector<1x8x32xf32>
    %1 = vector.shape_cast %0 : vector<1x8x32xf32> to vector<8x32xf32>
    %c0_2 = arith.constant 0 : index
    %c0_3 = arith.constant 0 : index
    %2 = vector.load %arg2[%c0_2, %c0_3] : memref<8x32xf32, #tpu.memory_space<vmem>>, vector<8x32xf32>
    %3 = arith.addf %1, %2 : vector<8x32xf32>
    %c0_4 = arith.constant 0 : index
    %c0_5 = arith.constant 0 : index
    %4 = vector.load %arg3[%c0_4, %c0_5] : memref<32x96xf32, #tpu.memory_space<vmem>>, vector<32x96xf32>
    %cst = arith.constant dense<0.000000e+00> : vector<8x96xf32>
    %5 = tpu.matmul %3, %4, %cst {dimension_numbers = #tpu.dot_dimension_numbers<[1], [0], [0], [1], [0, 0, 1, 1], [], []>} : vector<8x32xf32>, vector<32x96xf32>, vector<8x96xf32> -> vector<8x96xf32>
    %c0_6 = arith.constant 0 : index
    %c0_7 = arith.constant 0 : index
    %6 = vector.load %arg4[%c0_6, %c0_7] : memref<1x96xf32, #tpu.memory_space<vmem>>, vector<1x96xf32>
    %7 = vector.broadcast %6 : vector<1x96xf32> to vector<8x96xf32>
    %8 = arith.addf %5, %7 : vector<8x96xf32>
    %9 = vector.extract_strided_slice %8 {offsets = [0, 0], sizes = [8, 32], strides = [1, 1]} : vector<8x96xf32> to vector<8x32xf32>
    %cst_8 = arith.constant 0.353553385 : f32
    %10 = vector.broadcast %cst_8 : f32 to vector<8x32xf32>
    %11 = arith.mulf %9, %10 : vector<8x32xf32>
    %12 = vector.extract_strided_slice %8 {offsets = [0, 32], sizes = [8, 32], strides = [1, 1]} : vector<8x96xf32> to vector<8x32xf32>
    %13 = vector.extract_strided_slice %8 {offsets = [0, 64], sizes = [8, 32], strides = [1, 1]} : vector<8x96xf32> to vector<8x32xf32>
    %c0_9 = arith.constant 0 : index
    %c0_10 = arith.constant 0 : index
    %14 = vector.load %arg5[%c0_9, %c0_10] : memref<32x32xf32, #tpu.memory_space<vmem>>, vector<32x32xf32>
    %c0_11 = arith.constant 0 : index
    %c0_12 = arith.constant 0 : index
    %15 = vector.load %arg6[%c0_11, %c0_12] : memref<3x32xf32, #tpu.memory_space<vmem>>, vector<1x32xf32>
    %c1 = arith.constant 1 : index
    %c0_13 = arith.constant 0 : index
    %16 = vector.load %arg6[%c1, %c0_13] : memref<3x32xf32, #tpu.memory_space<vmem>>, vector<1x32xf32>
    %c2 = arith.constant 2 : index
    %c0_14 = arith.constant 0 : index
    %17 = vector.load %arg6[%c2, %c0_14] : memref<3x32xf32, #tpu.memory_space<vmem>>, vector<1x32xf32>
    %18 = vector.extract_strided_slice %11 {offsets = [0, 0], sizes = [8, 8], strides = [1, 1]} : vector<8x32xf32> to vector<8x8xf32>
    %19 = vector.extract_strided_slice %12 {offsets = [0, 0], sizes = [8, 8], strides = [1, 1]} : vector<8x32xf32> to vector<8x8xf32>
    %20 = vector.extract_strided_slice %13 {offsets = [0, 0], sizes = [8, 8], strides = [1, 1]} : vector<8x32xf32> to vector<8x8xf32>
    %cst_15 = arith.constant dense<0.000000e+00> : vector<8x8xf32>
    %21 = tpu.matmul %18, %19, %cst_15 {dimension_numbers = #tpu.dot_dimension_numbers<[1], [1], [0], [0], [0, 0, 1, 0], [], []>} : vector<8x8xf32>, vector<8x8xf32>, vector<8x8xf32> -> vector<8x8xf32>
    %cst_16 = arith.constant dense<0xFF800000> : vector<8xf32>
    %22 = vector.multi_reduction <maximumf>, %21, %cst_16 [1] : vector<8x8xf32> to vector<8xf32>
    %23 = vector.shape_cast %22 : vector<8xf32> to vector<8x1xf32>
    %24 = vector.broadcast %23 : vector<8x1xf32> to vector<8x8xf32>
    %25 = arith.subf %21, %24 : vector<8x8xf32>
    %26 = math.exp %25 : vector<8x8xf32>
    %cst_17 = arith.constant dense<0.000000e+00> : vector<8xf32>
    %27 = vector.multi_reduction <add>, %26, %cst_17 [1] : vector<8x8xf32> to vector<8xf32>
    %28 = vector.shape_cast %27 : vector<8xf32> to vector<8x1xf32>
    %29 = vector.broadcast %28 : vector<8x1xf32> to vector<8x8xf32>
    %30 = arith.divf %26, %29 : vector<8x8xf32>
    %cst_18 = arith.constant dense<0.000000e+00> : vector<8x8xf32>
    %31 = tpu.matmul %30, %20, %cst_18 {dimension_numbers = #tpu.dot_dimension_numbers<[1], [0], [0], [1], [0, 0, 1, 1], [], []>} : vector<8x8xf32>, vector<8x8xf32>, vector<8x8xf32> -> vector<8x8xf32>
    %32 = vector.extract_strided_slice %14 {offsets = [0, 0], sizes = [8, 32], strides = [1, 1]} : vector<32x32xf32> to vector<8x32xf32>
    %cst_19 = arith.constant dense<0.000000e+00> : vector<8x32xf32>
    %33 = tpu.matmul %31, %32, %cst_19 {dimension_numbers = #tpu.dot_dimension_numbers<[1], [0], [0], [1], [0, 0, 1, 1], [], []>} : vector<8x8xf32>, vector<8x32xf32>, vector<8x32xf32> -> vector<8x32xf32>
    %34 = vector.extract_strided_slice %11 {offsets = [0, 8], sizes = [8, 8], strides = [1, 1]} : vector<8x32xf32> to vector<8x8xf32>
    %35 = vector.extract_strided_slice %12 {offsets = [0, 8], sizes = [8, 8], strides = [1, 1]} : vector<8x32xf32> to vector<8x8xf32>
    %36 = vector.extract_strided_slice %13 {offsets = [0, 8], sizes = [8, 8], strides = [1, 1]} : vector<8x32xf32> to vector<8x8xf32>
    %cst_20 = arith.constant dense<0.000000e+00> : vector<8x8xf32>
    %37 = tpu.matmul %34, %35, %cst_20 {dimension_numbers = #tpu.dot_dimension_numbers<[1], [1], [0], [0], [0, 0, 1, 0], [], []>} : vector<8x8xf32>, vector<8x8xf32>, vector<8x8xf32> -> vector<8x8xf32>
    %cst_21 = arith.constant dense<0xFF800000> : vector<8xf32>
    %38 = vector.multi_reduction <maximumf>, %37, %cst_21 [1] : vector<8x8xf32> to vector<8xf32>
    %39 = vector.shape_cast %38 : vector<8xf32> to vector<8x1xf32>
    %40 = vector.broadcast %39 : vector<8x1xf32> to vector<8x8xf32>
    %41 = arith.subf %37, %40 : vector<8x8xf32>
    %42 = math.exp %41 : vector<8x8xf32>
    %cst_22 = arith.constant dense<0.000000e+00> : vector<8xf32>
    %43 = vector.multi_reduction <add>, %42, %cst_22 [1] : vector<8x8xf32> to vector<8xf32>
    %44 = vector.shape_cast %43 : vector<8xf32> to vector<8x1xf32>
    %45 = vector.broadcast %44 : vector<8x1xf32> to vector<8x8xf32>
    %46 = arith.divf %42, %45 : vector<8x8xf32>
    %cst_23 = arith.constant dense<0.000000e+00> : vector<8x8xf32>
    %47 = tpu.matmul %46, %36, %cst_23 {dimension_numbers = #tpu.dot_dimension_numbers<[1], [0], [0], [1], [0, 0, 1, 1], [], []>} : vector<8x8xf32>, vector<8x8xf32>, vector<8x8xf32> -> vector<8x8xf32>
    %48 = vector.extract_strided_slice %14 {offsets = [8, 0], sizes = [8, 32], strides = [1, 1]} : vector<32x32xf32> to vector<8x32xf32>
    %cst_24 = arith.constant dense<0.000000e+00> : vector<8x32xf32>
    %49 = tpu.matmul %47, %48, %cst_24 {dimension_numbers = #tpu.dot_dimension_numbers<[1], [0], [0], [1], [0, 0, 1, 1], [], []>} : vector<8x8xf32>, vector<8x32xf32>, vector<8x32xf32> -> vector<8x32xf32>
    %50 = arith.addf %33, %49 : vector<8x32xf32>
    %51 = vector.extract_strided_slice %11 {offsets = [0, 16], sizes = [8, 8], strides = [1, 1]} : vector<8x32xf32> to vector<8x8xf32>
    %52 = vector.extract_strided_slice %12 {offsets = [0, 16], sizes = [8, 8], strides = [1, 1]} : vector<8x32xf32> to vector<8x8xf32>
    %53 = vector.extract_strided_slice %13 {offsets = [0, 16], sizes = [8, 8], strides = [1, 1]} : vector<8x32xf32> to vector<8x8xf32>
    %cst_25 = arith.constant dense<0.000000e+00> : vector<8x8xf32>
    %54 = tpu.matmul %51, %52, %cst_25 {dimension_numbers = #tpu.dot_dimension_numbers<[1], [1], [0], [0], [0, 0, 1, 0], [], []>} : vector<8x8xf32>, vector<8x8xf32>, vector<8x8xf32> -> vector<8x8xf32>
    %cst_26 = arith.constant dense<0xFF800000> : vector<8xf32>
    %55 = vector.multi_reduction <maximumf>, %54, %cst_26 [1] : vector<8x8xf32> to vector<8xf32>
    %56 = vector.shape_cast %55 : vector<8xf32> to vector<8x1xf32>
    %57 = vector.broadcast %56 : vector<8x1xf32> to vector<8x8xf32>
    %58 = arith.subf %54, %57 : vector<8x8xf32>
    %59 = math.exp %58 : vector<8x8xf32>
    %cst_27 = arith.constant dense<0.000000e+00> : vector<8xf32>
    %60 = vector.multi_reduction <add>, %59, %cst_27 [1] : vector<8x8xf32> to vector<8xf32>
    %61 = vector.shape_cast %60 : vector<8xf32> to vector<8x1xf32>
    %62 = vector.broadcast %61 : vector<8x1xf32> to vector<8x8xf32>
    %63 = arith.divf %59, %62 : vector<8x8xf32>
    %cst_28 = arith.constant dense<0.000000e+00> : vector<8x8xf32>
    %64 = tpu.matmul %63, %53, %cst_28 {dimension_numbers = #tpu.dot_dimension_numbers<[1], [0], [0], [1], [0, 0, 1, 1], [], []>} : vector<8x8xf32>, vector<8x8xf32>, vector<8x8xf32> -> vector<8x8xf32>
    %65 = vector.extract_strided_slice %14 {offsets = [16, 0], sizes = [8, 32], strides = [1, 1]} : vector<32x32xf32> to vector<8x32xf32>
    %cst_29 = arith.constant dense<0.000000e+00> : vector<8x32xf32>
    %66 = tpu.matmul %64, %65, %cst_29 {dimension_numbers = #tpu.dot_dimension_numbers<[1], [0], [0], [1], [0, 0, 1, 1], [], []>} : vector<8x8xf32>, vector<8x32xf32>, vector<8x32xf32> -> vector<8x32xf32>
    %67 = arith.addf %50, %66 : vector<8x32xf32>
    %68 = vector.extract_strided_slice %11 {offsets = [0, 24], sizes = [8, 8], strides = [1, 1]} : vector<8x32xf32> to vector<8x8xf32>
    %69 = vector.extract_strided_slice %12 {offsets = [0, 24], sizes = [8, 8], strides = [1, 1]} : vector<8x32xf32> to vector<8x8xf32>
    %70 = vector.extract_strided_slice %13 {offsets = [0, 24], sizes = [8, 8], strides = [1, 1]} : vector<8x32xf32> to vector<8x8xf32>
    %cst_30 = arith.constant dense<0.000000e+00> : vector<8x8xf32>
    %71 = tpu.matmul %68, %69, %cst_30 {dimension_numbers = #tpu.dot_dimension_numbers<[1], [1], [0], [0], [0, 0, 1, 0], [], []>} : vector<8x8xf32>, vector<8x8xf32>, vector<8x8xf32> -> vector<8x8xf32>
    %cst_31 = arith.constant dense<0xFF800000> : vector<8xf32>
    %72 = vector.multi_reduction <maximumf>, %71, %cst_31 [1] : vector<8x8xf32> to vector<8xf32>
    %73 = vector.shape_cast %72 : vector<8xf32> to vector<8x1xf32>
    %74 = vector.broadcast %73 : vector<8x1xf32> to vector<8x8xf32>
    %75 = arith.subf %71, %74 : vector<8x8xf32>
    %76 = math.exp %75 : vector<8x8xf32>
    %cst_32 = arith.constant dense<0.000000e+00> : vector<8xf32>
    %77 = vector.multi_reduction <add>, %76, %cst_32 [1] : vector<8x8xf32> to vector<8xf32>
    %78 = vector.shape_cast %77 : vector<8xf32> to vector<8x1xf32>
    %79 = vector.broadcast %78 : vector<8x1xf32> to vector<8x8xf32>
    %80 = arith.divf %76, %79 : vector<8x8xf32>
    %cst_33 = arith.constant dense<0.000000e+00> : vector<8x8xf32>
    %81 = tpu.matmul %80, %70, %cst_33 {dimension_numbers = #tpu.dot_dimension_numbers<[1], [0], [0], [1], [0, 0, 1, 1], [], []>} : vector<8x8xf32>, vector<8x8xf32>, vector<8x8xf32> -> vector<8x8xf32>
    %82 = vector.extract_strided_slice %14 {offsets = [24, 0], sizes = [8, 32], strides = [1, 1]} : vector<32x32xf32> to vector<8x32xf32>
    %cst_34 = arith.constant dense<0.000000e+00> : vector<8x32xf32>
    %83 = tpu.matmul %81, %82, %cst_34 {dimension_numbers = #tpu.dot_dimension_numbers<[1], [0], [0], [1], [0, 0, 1, 1], [], []>} : vector<8x8xf32>, vector<8x32xf32>, vector<8x32xf32> -> vector<8x32xf32>
    %84 = arith.addf %67, %83 : vector<8x32xf32>
    %85 = vector.broadcast %15 : vector<1x32xf32> to vector<8x32xf32>
    %86 = arith.addf %84, %85 : vector<8x32xf32>
    %87 = arith.addf %3, %86 : vector<8x32xf32>
    %cst_35 = arith.constant dense<0.000000e+00> : vector<8xf32>
    %88 = vector.multi_reduction <add>, %87, %cst_35 [1] : vector<8x32xf32> to vector<8xf32>
    %89 = vector.shape_cast %88 : vector<8xf32> to vector<8x1xf32>
    %cst_36 = arith.constant 3.200000e+01 : f32
    %90 = vector.broadcast %cst_36 : f32 to vector<8x1xf32>
    %91 = arith.divf %89, %90 : vector<8x1xf32>
    %92 = vector.broadcast %91 : vector<8x1xf32> to vector<8x32xf32>
    %93 = arith.subf %87, %92 : vector<8x32xf32>
    %94 = arith.mulf %93, %93 : vector<8x32xf32>
    %cst_37 = arith.constant dense<0.000000e+00> : vector<8xf32>
    %95 = vector.multi_reduction <add>, %94, %cst_37 [1] : vector<8x32xf32> to vector<8xf32>
    %96 = vector.shape_cast %95 : vector<8xf32> to vector<8x1xf32>
    %cst_38 = arith.constant 3.200000e+01 : f32
    %97 = vector.broadcast %cst_38 : f32 to vector<8x1xf32>
    %98 = arith.divf %96, %97 : vector<8x1xf32>
    %cst_39 = arith.constant 9.99999974E-6 : f32
    %99 = vector.broadcast %cst_39 : f32 to vector<8x1xf32>
    %100 = arith.addf %98, %99 : vector<8x1xf32>
    %101 = math.rsqrt %100 : vector<8x1xf32>
    %102 = vector.broadcast %101 : vector<8x1xf32> to vector<8x32xf32>
    %103 = arith.mulf %93, %102 : vector<8x32xf32>
    %104 = vector.broadcast %16 : vector<1x32xf32> to vector<8x32xf32>
    %105 = arith.mulf %103, %104 : vector<8x32xf32>
    %106 = vector.broadcast %17 : vector<1x32xf32> to vector<8x32xf32>
    %107 = arith.addf %105, %106 : vector<8x32xf32>
    %c0_40 = arith.constant 0 : index
    %c0_41 = arith.constant 0 : index
    %c0_42 = arith.constant 0 : index
    %108 = vector.load %arg7[%c0_40, %c0_41, %c0_42] : memref<1x8x32xf32, #tpu.memory_space<vmem>>, vector<1x8x32xf32>
    %109 = vector.shape_cast %108 : vector<1x8x32xf32> to vector<8x32xf32>
    %110 = vector.shape_cast %107 : vector<8x32xf32> to vector<1x8x32xf32>
    tpu.vector_store %arg7[%c0_40, %c0_41, %c0_42], %110 {strides = array<i32>} : memref<1x8x32xf32, #tpu.memory_space<vmem>>, vector<1x8x32xf32>,
    return
  }
  func.func @transform_0(%arg0: i32) -> (i32, i32, i32) {
    %c0_i32 = arith.constant 0 : i32
    %c0_i32_0 = arith.constant 0 : i32
    %c0_i32_1 = arith.constant 0 : i32
    return %arg0, %c0_i32, %c0_i32_0 : i32, i32, i32
  }
  func.func @transform_1(%arg0: i32) -> (i32, i32) {
    %c0_i32 = arith.constant 0 : i32
    %c0_i32_0 = arith.constant 0 : i32
    %c0_i32_1 = arith.constant 0 : i32
    return %c0_i32, %c0_i32_0 : i32, i32
  }
  func.func @transform_2(%arg0: i32) -> (i32, i32) {
    %c0_i32 = arith.constant 0 : i32
    %c0_i32_0 = arith.constant 0 : i32
    %c0_i32_1 = arith.constant 0 : i32
    return %c0_i32, %c0_i32_0 : i32, i32
  }
  func.func @transform_3(%arg0: i32) -> (i32, i32) {
    %c0_i32 = arith.constant 0 : i32
    %c0_i32_0 = arith.constant 0 : i32
    %c0_i32_1 = arith.constant 0 : i32
    return %c0_i32, %c0_i32_0 : i32, i32
  }
  func.func @transform_4(%arg0: i32) -> (i32, i32) {
    %c0_i32 = arith.constant 0 : i32
    %c0_i32_0 = arith.constant 0 : i32
    %c0_i32_1 = arith.constant 0 : i32
    return %c0_i32, %c0_i32_0 : i32, i32
  }
  func.func @transform_5(%arg0: i32) -> (i32, i32) {
    %c0_i32 = arith.constant 0 : i32
    %c0_i32_0 = arith.constant 0 : i32
    %c0_i32_1 = arith.constant 0 : i32
    return %c0_i32, %c0_i32_0 : i32, i32
  }
  func.func @transform_6(%arg0: i32) -> (i32, i32, i32) {
    %c0_i32 = arith.constant 0 : i32
    %c0_i32_0 = arith.constant 0 : i32
    %c0_i32_1 = arith.constant 0 : i32
    return %arg0, %c0_i32, %c0_i32_0 : i32, i32, i32
  }
}

</mosaic_0001>

<llo_original>
// kernel: tpu_custom_call.1
$region0: #{tpu_custom_call.1}
  #allocation0 [shape = 'u32[]', space=smem, size = 0x4, offset = 0x4, fixed_abs, tag = 'smem constant byte address 0x4 - core index']
  #allocation1 [shape = 'u32[144,128]{1,0:T(1,128)}', space=vmem, size = 0x12000, scoped, tag = 'internal scratch']
  %s0 = inlined_call_operand.hbm [shape: f32[2,8,32], index: 0, kind: input, shape index: {}]
  %s1 = inlined_call_operand.hbm [shape: f32[8,32], index: 1, kind: input, shape index: {}]
  %s2 = inlined_call_operand.hbm [shape: f32[32,96], index: 2, kind: input, shape index: {}]
  %s3 = inlined_call_operand.vmem [shape: f32[1,96], index: 3, kind: input, shape index: {}]
  %s4 = inlined_call_operand.hbm [shape: f32[32,32], index: 4, kind: input, shape index: {}]
  %s5 = inlined_call_operand.vmem [shape: f32[3,32], index: 5, kind: input, shape index: {}]
  %s6 = inlined_call_operand.hbm [shape: f32[2,8,32], index: 6, kind: output, shape index: {}]
  %s7 = sld [smem:[#allocation0]]
  $region73: #{tpu_custom_call.1} parent=0
    _
  %s9 = ssub.s32 1, %s7
  %s10 = scalar_select 0, %s9, %s7
  $region1: #{tpu_custom_call.1} parent=0
    #allocation2 [shape = 'u8[8192]{0}', space=vmem, size = 0x2000, scoped, tag = 'input window, operand 0']
    #allocation3 [shape = 's32[2]{0}', space=sflag, size = 0x8, scoped, tag = 'scoped memory for tpu_custom_call.1']
    #allocation4 [shape = 's32[2]{0}', space=sflag, size = 0x8, scoped, tag = 'scoped memory for tpu_custom_call.1']
    #allocation5 [shape = 'u8[4096]{0}', space=vmem, size = 0x1000, scoped, tag = 'input window, operand 1, single buffered']
    #allocation6 [shape = 's32[1]{0}', space=sflag, size = 0x4, scoped, tag = 'scoped memory for tpu_custom_call.1']
    #allocation7 [shape = 'u8[16384]{0}', space=vmem, size = 0x4000, scoped, tag = 'input window, operand 2, single buffered']
    #allocation8 [shape = 'u8[16384]{0}', space=vmem, size = 0x4000, scoped, tag = 'input window, operand 4, single buffered']
    #allocation9 [shape = 's32[1]{0}', space=sflag, size = 0x4, scoped, tag = 'scoped memory for tpu_custom_call.1']
    #allocation10 [shape = 'u8[8192]{0}', space=vmem, size = 0x2000, scoped, tag = 'output window, operand 0']
    %11 = vsyncpa [#allocation3], 0
    %s12 = scalar_lea.sflag [#allocation3], 1
    %13 = vsyncpa %s12, 0
    %14 = vsyncpa [#allocation6], 0
    %15 = vsyncpa [#allocation9], 0
    %16 = vsyncpa [#allocation4], 0
    %s17 = scalar_lea.sflag [#allocation4], 1
    %18 = vsyncpa %s17, 0
    loop: start=0, step=1, limit=4
    $region2: #{tpu_custom_call.1} parent=1 // loop_pre_header
      _
    $region3: #{tpu_custom_call.1} parent=1 // loop_header
      %s20 = sphi 0, %s24
      %p21 = scmp.ge.s32.totalorder %s20, 4
      %s30 = sphi 0, %s32
      %s33 = sphi 0, %s30
      %s34 = sphi 0, %s33
      %s50 = sphi 0, %s34
      %s54 = sphi 0, %s54
      %s56 = sphi 0, %s54
      %s57 = sphi 0, %s56
      %s71 = sphi 0, %s57
      %s75 = sphi 0, %s75
      %s77 = sphi 0, %s75
      %s78 = sphi 0, %s77
      %s92 = sphi 0, %s78
      %s96 = sphi 0, %s96
      %s98 = sphi 0, %s96
      %s99 = sphi 0, %s98
      %s113 = sphi 0, %s99
      %s117 = sphi 0, %s117
      %s119 = sphi 0, %s117
      %s120 = sphi 0, %s119
      %s134 = sphi 0, %s120
      %s138 = sphi 0, %s138
      %s140 = sphi 0, %s138
      %s141 = sphi 0, %s140
      %s155 = sphi 0, %s141
      %s161 = sphi 0, %s163
      %s164 = sphi 0, %s161
      %s165 = sphi 0, %s164
      %s181 = sphi 0, %s165
    $region4: #{tpu_custom_call.1} parent=1 // loop_header_branch
      %23 = sbr.rel (%p21) target = $region8
    $region5: #{tpu_custom_call.1} parent=1 // loop_body
      %s25 = ssub.s32 %s20, 1
      %s26 = ssub.s32 %s20, 2
      %s27 = sadd.s32 %s20, 1
      %s28 = ssub.s32 %s20, %s27
      %p29 = scmp.eq.s32.totalorder %s28, 0
      %s31 = sadd.s32 %s30, 1
      %s32 = scalar_select %p29, %s30, %s31
      %p35 = pneg %p29
      %p36 = scmp.eq.s32.totalorder %s20, 1
      %p37 = por %p35, %p36
      %p38 = scmp.ne.s32.totalorder %s30, %s33
      %p39 = scmp.eq.s32.totalorder %s20, 0
      %p40 = por %p38, %p39
      %p41 = scmp.ne.s32.totalorder %s30, %s33
      %p42 = scmp.eq.s32.totalorder %s25, 1
      %p43 = por %p41, %p42
      %p44 = scmp.ne.s32.totalorder %s33, %s34
      %p45 = scmp.eq.s32.totalorder %s25, 0
      %p46 = por %p44, %p45
      %p47 = scmp.ne.s32.totalorder %s33, %s34
      %p48 = scmp.eq.s32.totalorder %s26, 1
      %p49 = por %p47, %p48
      %p51 = scmp.ne.s32.totalorder %s34, %s50
      %p52 = scmp.eq.s32.totalorder %s26, 0
      %p53 = por %p51, %p52
      %s55 = sadd.s32 %s54, 1
      %p58 = scmp.eq.s32.totalorder %s20, 1
      %p59 = scmp.ne.s32.totalorder %s54, %s56
      %p60 = scmp.eq.s32.totalorder %s20, 0
      %p61 = por %p59, %p60
      %p62 = scmp.ne.s32.totalorder %s54, %s56
      %p63 = scmp.eq.s32.totalorder %s25, 1
      %p64 = por %p62, %p63
      %p65 = scmp.ne.s32.totalorder %s56, %s57
      %p66 = scmp.eq.s32.totalorder %s25, 0
      %p67 = por %p65, %p66
      %p68 = scmp.ne.s32.totalorder %s56, %s57
      %p69 = scmp.eq.s32.totalorder %s26, 1
      %p70 = por %p68, %p69
      %p72 = scmp.ne.s32.totalorder %s57, %s71
      %p73 = scmp.eq.s32.totalorder %s26, 0
      %p74 = por %p72, %p73
      %s76 = sadd.s32 %s75, 1
      %p79 = scmp.eq.s32.totalorder %s20, 1
      %p80 = scmp.ne.s32.totalorder %s75, %s77
      %p81 = scmp.eq.s32.totalorder %s20, 0
      %p82 = por %p80, %p81
      %p83 = scmp.ne.s32.totalorder %s75, %s77
      %p84 = scmp.eq.s32.totalorder %s25, 1
      %p85 = por %p83, %p84
      %p86 = scmp.ne.s32.totalorder %s77, %s78
      %p87 = scmp.eq.s32.totalorder %s25, 0
      %p88 = por %p86, %p87
      %p89 = scmp.ne.s32.totalorder %s77, %s78
      %p90 = scmp.eq.s32.totalorder %s26, 1
      %p91 = por %p89, %p90
      %p93 = scmp.ne.s32.totalorder %s78, %s92
      %p94 = scmp.eq.s32.totalorder %s26, 0
      %p95 = por %p93, %p94
      %s97 = sadd.s32 %s96, 1
      %p100 = scmp.eq.s32.totalorder %s20, 1
      %p101 = scmp.ne.s32.totalorder %s96, %s98
      %p102 = scmp.eq.s32.totalorder %s20, 0
      %p103 = por %p101, %p102
      %p104 = scmp.ne.s32.totalorder %s96, %s98
      %p105 = scmp.eq.s32.totalorder %s25, 1
      %p106 = por %p104, %p105
      %p107 = scmp.ne.s32.totalorder %s98, %s99
      %p108 = scmp.eq.s32.totalorder %s25, 0
      %p109 = por %p107, %p108
      %p110 = scmp.ne.s32.totalorder %s98, %s99
      %p111 = scmp.eq.s32.totalorder %s26, 1
      %p112 = por %p110, %p111
      %p114 = scmp.ne.s32.totalorder %s99, %s113
      %p115 = scmp.eq.s32.totalorder %s26, 0
      %p116 = por %p114, %p115
      %s118 = sadd.s32 %s117, 1
      %p121 = scmp.eq.s32.totalorder %s20, 1
      %p122 = scmp.ne.s32.totalorder %s117, %s119
      %p123 = scmp.eq.s32.totalorder %s20, 0
      %p124 = por %p122, %p123
      %p125 = scmp.ne.s32.totalorder %s117, %s119
      %p126 = scmp.eq.s32.totalorder %s25, 1
      %p127 = por %p125, %p126
      %p128 = scmp.ne.s32.totalorder %s119, %s120
      %p129 = scmp.eq.s32.totalorder %s25, 0
      %p130 = por %p128, %p129
      %p131 = scmp.ne.s32.totalorder %s119, %s120
      %p132 = scmp.eq.s32.totalorder %s26, 1
      %p133 = por %p131, %p132
      %p135 = scmp.ne.s32.totalorder %s120, %s134
      %p136 = scmp.eq.s32.totalorder %s26, 0
      %p137 = por %p135, %p136
      %s139 = sadd.s32 %s138, 1
      %p142 = scmp.eq.s32.totalorder %s20, 1
      %p143 = scmp.ne.s32.totalorder %s138, %s140
      %p144 = scmp.eq.s32.totalorder %s20, 0
      %p145 = por %p143, %p144
      %p146 = scmp.ne.s32.totalorder %s138, %s140
      %p147 = scmp.eq.s32.totalorder %s25, 1
      %p148 = por %p146, %p147
      %p149 = scmp.ne.s32.totalorder %s140, %s141
      %p150 = scmp.eq.s32.totalorder %s25, 0
      %p151 = por %p149, %p150
      %p152 = scmp.ne.s32.totalorder %s140, %s141
      %p153 = scmp.eq.s32.totalorder %s26, 1
      %p154 = por %p152, %p153
      %p156 = scmp.ne.s32.totalorder %s141, %s155
      %p157 = scmp.eq.s32.totalorder %s26, 0
      %p158 = por %p156, %p157
      %s159 = ssub.s32 %s20, %s27
      %p160 = scmp.eq.s32.totalorder %s159, 0
      %s162 = sadd.s32 %s161, 1
      %s163 = scalar_select %p160, %s161, %s162
      %p166 = pneg %p160
      %p167 = scmp.eq.s32.totalorder %s20, 1
      %p168 = por %p166, %p167
      %p169 = scmp.ne.s32.totalorder %s161, %s164
      %p170 = scmp.eq.s32.totalorder %s20, 0
      %p171 = por %p169, %p170
      %p172 = scmp.ne.s32.totalorder %s161, %s164
      %p173 = scmp.eq.s32.totalorder %s25, 1
      %p174 = por %p172, %p173
      %p175 = scmp.ne.s32.totalorder %s164, %s165
      %p176 = scmp.eq.s32.totalorder %s25, 0
      %p177 = por %p175, %p176
      %p178 = scmp.ne.s32.totalorder %s164, %s165
      %p179 = scmp.eq.s32.totalorder %s26, 1
      %p180 = por %p178, %p179
      %p182 = scmp.ne.s32.totalorder %s165, %s181
      %p183 = scmp.eq.s32.totalorder %s26, 0
      %p184 = por %p182, %p183
      %p185 = scmp.le.s32.totalorder 1, %s20
      %p186 = scmp.lt.s32.totalorder %s20, 3
      %p187 = pnand %p185, %p186
      %p188 = pneg %p187
      // Predicated region
      $region9: #{tpu_custom_call.1} parent=5 // pred_check
        _
      $region10: #{tpu_custom_call.1} parent=5 // pred_check_branch
        %190 = sbr.rel (%p187) target = $region12
      $region11: #{tpu_custom_call.1} parent=5 // pred_region
        %s191 = ssub.s32 %s20, 1
        // Predicated region
        $region13: #{tpu_custom_call.1} parent=11 // pred_check
          %p192 = pneg %p67
        $region14: #{tpu_custom_call.1} parent=11 // pred_check_branch
          %194 = sbr.rel (%p192) target = $region16
        $region15: #{tpu_custom_call.1} parent=11 // pred_region
          %s196 = ssub.s32 128, 128
          %197 = vsyncadd [#allocation6], %s196
          %s199 = sshll.u32 [#allocation5], 4
          %s200 = int_to_ptr.vmem [resolvable:$true] %s199
          %202 = dma.hbm_to_vmem [thread:$0]  %s1, 128, %s200, [#allocation6]
        $region16: #{tpu_custom_call.1} parent=11 // pred_fallthru
          _
        // Predicated region
        $region17: #{tpu_custom_call.1} parent=11 // pred_check
          %p203 = pneg %p88
        $region18: #{tpu_custom_call.1} parent=11 // pred_check_branch
          %205 = sbr.rel (%p203) target = $region20
        $region19: #{tpu_custom_call.1} parent=11 // pred_region
          %s207 = ssub.s32 512, 512
          %208 = vsyncadd [#allocation6], %s207
          %s209 = sshll.u32 [#allocation7], 4
          %s210 = int_to_ptr.vmem [resolvable:$true] %s209
          %215 = dma.hbm_to_vmem [thread:$0]  %s2, 512, %s210, [#allocation6], 128, 128, 8
        $region20: #{tpu_custom_call.1} parent=11 // pred_fallthru
          _
        // Predicated region
        $region21: #{tpu_custom_call.1} parent=11 // pred_check
          %p216 = pneg %p109
        $region22: #{tpu_custom_call.1} parent=11 // pred_check_branch
          %218 = sbr.rel (%p216) target = $region24
        $region23: #{tpu_custom_call.1} parent=11 // pred_region
          _
        $region24: #{tpu_custom_call.1} parent=11 // pred_fallthru
          _
        // Predicated region
        $region25: #{tpu_custom_call.1} parent=11 // pred_check
          %p219 = pneg %p130
        $region26: #{tpu_custom_call.1} parent=11 // pred_check_branch
          %221 = sbr.rel (%p219) target = $region28
        $region27: #{tpu_custom_call.1} parent=11 // pred_region
          %s223 = ssub.s32 512, 512
          %224 = vsyncadd [#allocation9], %s223
          %s225 = sshll.u32 [#allocation8], 4
          %s226 = int_to_ptr.vmem [resolvable:$true] %s225
          %231 = dma.hbm_to_vmem [thread:$0]  %s4, 512, %s226, [#allocation9], 128, 128, 8
        $region28: #{tpu_custom_call.1} parent=11 // pred_fallthru
          _
        // Predicated region
        $region29: #{tpu_custom_call.1} parent=11 // pred_check
          %p232 = pneg %p151
        $region30: #{tpu_custom_call.1} parent=11 // pred_check_branch
          %234 = sbr.rel (%p232) target = $region32
        $region31: #{tpu_custom_call.1} parent=11 // pred_region
          _
        $region32: #{tpu_custom_call.1} parent=11 // pred_fallthru
          _
      $region12: #{tpu_custom_call.1} parent=5 // pred_fallthru
        _
      %p235 = scmp.lt.s32.totalorder %s20, 2
      // Predicated region
      $region33: #{tpu_custom_call.1} parent=5 // pred_check
        %p236 = pneg %p235
      $region34: #{tpu_custom_call.1} parent=5 // pred_check_branch
        %238 = sbr.rel (%p236) target = $region36
      $region35: #{tpu_custom_call.1} parent=5 // pred_region
        // Predicated region
        $region37: #{tpu_custom_call.1} parent=35 // pred_check
          %p239 = pneg %p40
        $region38: #{tpu_custom_call.1} parent=35 // pred_check_branch
          %241 = sbr.rel (%p239) target = $region40
        $region39: #{tpu_custom_call.1} parent=35 // pred_region
          %s242 = sand.u32 %s30, 1
          %s243 = scalar_lea.sflag [#allocation3], %s242
          %s244 = sand.u32 %s30, 1
          %s245 = smul.addr %s244, 8
          %s246 = scalar_lea.vmem [#allocation2], %s245
          %s248 = ssub.s32 128, 128
          %249 = vsyncadd %s243, %s248
          %s250 = smul.addr %s20, 128
          %s251 = scalar_lea.hbm %s0, %s250
          %s253 = sshll.u32 %s246, 4
          %s254 = int_to_ptr.vmem [resolvable:$true] %s253
          %256 = dma.hbm_to_vmem [thread:$0]  %s251, 128, %s254, %s243
        $region40: #{tpu_custom_call.1} parent=35 // pred_fallthru
          _
      $region36: #{tpu_custom_call.1} parent=5 // pred_fallthru
        _
      %p257 = scmp.le.s32.totalorder 1, %s20
      %p258 = scmp.lt.s32.totalorder %s20, 3
      %p259 = pnand %p257, %p258
      %p260 = pneg %p259
      // Predicated region
      $region41: #{tpu_custom_call.1} parent=5 // pred_check
        _
      $region42: #{tpu_custom_call.1} parent=5 // pred_check_branch
        %262 = sbr.rel (%p259) target = $region44
      $region43: #{tpu_custom_call.1} parent=5 // pred_region
        %s263 = ssub.s32 %s20, 1
        %s264 = sand.u32 %s33, 1
        %s265 = scalar_lea.sflag [#allocation3], %s264
        %s266 = sand.u32 %s33, 1
        %s267 = smul.addr %s266, 8
        %s268 = scalar_lea.vmem [#allocation2], %s267
        // Predicated region
        $region45: #{tpu_custom_call.1} parent=43 // pred_check
          %p269 = pneg %p46
        $region46: #{tpu_custom_call.1} parent=43 // pred_check_branch
          %271 = sbr.rel (%p269) target = $region48
        $region47: #{tpu_custom_call.1} parent=43 // pred_region
          %272 = dma.done %s265, 128
        $region48: #{tpu_custom_call.1} parent=43 // pred_fallthru
          _
        // Predicated region
        $region49: #{tpu_custom_call.1} parent=43 // pred_check
          %p273 = pneg %p67
        $region50: #{tpu_custom_call.1} parent=43 // pred_check_branch
          %275 = sbr.rel (%p273) target = $region52
        $region51: #{tpu_custom_call.1} parent=43 // pred_region
          %276 = dma.done [#allocation6], 128
        $region52: #{tpu_custom_call.1} parent=43 // pred_fallthru
          _
        // Predicated region
        $region53: #{tpu_custom_call.1} parent=43 // pred_check
          %p277 = pneg %p88
        $region54: #{tpu_custom_call.1} parent=43 // pred_check_branch
          %279 = sbr.rel (%p277) target = $region56
        $region55: #{tpu_custom_call.1} parent=43 // pred_region
          %280 = dma.done [#allocation6], 512
        $region56: #{tpu_custom_call.1} parent=43 // pred_fallthru
          _
        // Predicated region
        $region57: #{tpu_custom_call.1} parent=43 // pred_check
          %p281 = pneg %p130
        $region58: #{tpu_custom_call.1} parent=43 // pred_check_branch
          %283 = sbr.rel (%p281) target = $region60
        $region59: #{tpu_custom_call.1} parent=43 // pred_region
          %284 = dma.done [#allocation9], 512
        $region60: #{tpu_custom_call.1} parent=43 // pred_fallthru
          _
        %s285 = sand.u32 %s33, 1
        %s286 = scalar_lea.sflag [#allocation3], %s285
        %s287 = sand.u32 %s33, 1
        %s288 = smul.addr %s287, 8
        %s289 = scalar_lea.vmem [#allocation2], %s288
        %p290 = pneg %p46
        %p291 = pneg %p43
        %p292 = pneg %p67
        %p293 = pneg %p64
        %p294 = pneg %p88
        %p295 = pneg %p85
        %p296 = pneg %p109
        %p297 = pneg %p106
        %p298 = pneg %p130
        %p299 = pneg %p127
        %p300 = pneg %p151
        %p301 = pneg %p148
        %p302 = pneg %p177
        %p303 = pneg %p174
        %s304 = sand.u32 %s164, 1
        %s305 = scalar_lea.sflag [#allocation4], %s304
        %s306 = sand.u32 %s164, 1
        %s307 = smul.addr %s306, 8
        %s308 = scalar_lea.vmem [#allocation10], %s307
        %v309 = vld [vmem:[%s268] sm:$0xff]
        %v310 = vld [vmem:[#allocation5] sm:$0xff]
        %v311 = vadd.f32 %v309, %v310
        %v312 = vld [vmem:[#allocation7] sm:$0xff]
        %v313 = vld [vmem:[#allocation7 + $0x8] sm:$0xff]
        %v314 = vld [vmem:[#allocation7 + $0x10] sm:$0xff]
        %v315 = vld [vmem:[#allocation7 + $0x18] sm:$0xff]
        %v316 = vld [vmem:[%s3] sm:$0x1]
        %v318 = vlaneseq
        %v319 = vshrl.u32 %v318, 7
        %v320 = vsub.s32 0, %v319
        %v321 = vrot.slane %v316, %v320
        %vm323 = vcmask 261120
        %v325 = vsel %vm323, %v311, 0
        %327 = vmatprep.subr.mxu0 0.0
        %328 = vmatpush1.msra.mxu0 0.0
        %329 = vmatprep.subr.mxu0 0.0
        %330 = vmatpush1.msra.mxu0 0.0
        %331 = vmatprep.subr.mxu0 0.0
        %332 = vmatpush1.msra.mxu0 0.0
        %333 = vmatprep.subr.mxu0 0.0
        %334 = vmatpush1.msra.mxu0 0.0
        %335 = vmatprep.subr.mxu0 0.0
        %336 = vmatpush1.msra.mxu0 0.0
        %337 = vmatprep.subr.mxu0 0.0
        %338 = vmatpush1.msra.mxu0 0.0
        %339 = vmatprep.subr.mxu0 0.0
        %340 = vmatpush1.msra.mxu0 0.0
        %341 = vmatprep.subr.mxu0 0.0
        %342 = vmatpush1.msra.mxu0 0.0
        %343 = vmatprep.subr.mxu0 0.0
        %344 = vmatpush1.msra.mxu0 0.0
        %345 = vmatprep.subr.mxu0 0.0
        %346 = vmatpush1.msra.mxu0 0.0
        %347 = vmatprep.subr.mxu0 0.0
        %348 = vmatpush1.msra.mxu0 0.0
        %349 = vmatprep.subr.mxu0 0.0
        %350 = vmatpush1.msra.mxu0 0.0
        %351 = vmatprep.subr.mxu0 0.0
        %352 = vmatpush1.msra.mxu0 %v315
        %353 = vmatprep.subr.mxu0 0.0
        %354 = vmatpush1.msra.mxu0 %v314
        %355 = vmatprep.subr.mxu0 0.0
        %356 = vmatpush1.msra.mxu0 %v313
        %357 = vmatprep.subr.mxu0 0.0
        %358 = vmatpush1.msra.mxu0 %v312
        %359 = vmatprep.subr.mxu0 0.0
        %360 = vmatpush2.msra.mxu0 0.0
        %361 = vmatprep.subr.mxu0 0.0
        %362 = vmatpush2.msra.mxu0 0.0
        %363 = vmatprep.subr.mxu0 0.0
        %364 = vmatpush2.msra.mxu0 0.0
        %365 = vmatprep.subr.mxu0 0.0
        %366 = vmatpush2.msra.mxu0 0.0
        %367 = vmatprep.subr.mxu0 0.0
        %368 = vmatpush2.msra.mxu0 0.0
        %369 = vmatprep.subr.mxu0 0.0
        %370 = vmatpush2.msra.mxu0 0.0
        %371 = vmatprep.subr.mxu0 0.0
        %372 = vmatpush2.msra.mxu0 0.0
        %373 = vmatprep.subr.mxu0 0.0
        %374 = vmatpush2.msra.mxu0 0.0
        %375 = vmatprep.subr.mxu0 0.0
        %376 = vmatpush2.msra.mxu0 0.0
        %377 = vmatprep.subr.mxu0 0.0
        %378 = vmatpush2.msra.mxu0 0.0
        %379 = vmatprep.subr.mxu0 0.0
        %380 = vmatpush2.msra.mxu0 0.0
        %381 = vmatprep.subr.mxu0 0.0
        %382 = vmatpush2.msra.mxu0 0.0
        %383 = vmatprep.subr.mxu0 0.0
        %384 = vmatpush2.msra.mxu0 0.0
        %385 = vmatprep.subr.mxu0 0.0
        %386 = vmatpush2.msra.mxu0 0.0
        %387 = vmatprep.subr.mxu0 0.0
        %388 = vmatpush2.msra.mxu0 0.0
        %389 = vmatprep.subr.mxu0 0.0
        %390 = vmatpush2.msra.mxu0 0.0
        %391 = vmatprep.mubr.f32.mxu0 0.0
        %392 = vmatmul.mubr.f32.gmra.mxu0 %v325
        %v393 = vpop.f32.mrf.mxu0
        %v394 = vadd.f32 %v321, %v393
        %v395 = vpop.f32.mrf.mxu0
        %396 = vdwg.mxu0
        %v397 = vmul.f32 %v394, 0.35355338
        %v398 = vld [vmem:[#allocation8] sm:$0xff]
        %v399 = vld [vmem:[#allocation8 + $0x8] sm:$0xff]
        %v400 = vld [vmem:[#allocation8 + $0x10] sm:$0xff]
        %v401 = vld [vmem:[#allocation8 + $0x18] sm:$0xff]
        %v402 = vld [vmem:[%s5] sm:$0x1]
        %v403 = vld [vmem:[%s5 + $0x1] sm:$0x1]
        %v404 = vld [vmem:[%s5 + $0x2] sm:$0x1]
        %406 = vrot.lane.b32.xlu0 %v394, 96
        %v407 = vpop.permute.xlu0 %406
        %vm408 = vcmask 64512
        %v410 = vsel %vm408, %v397, 0
        %v412 = vsel %vm408, %v407, 0
        %414 = vmatprep.subr.mxu0 0.0
        %415 = vmatpush1.xpose.msra.mxu0 0.0
        %416 = vmatprep.subr.mxu0 0.0
        %417 = vmatpush1.xpose.msra.mxu0 0.0
        %418 = vmatprep.subr.mxu0 0.0
        %419 = vmatpush1.xpose.msra.mxu0 0.0
        %420 = vmatprep.subr.mxu0 0.0
        %421 = vmatpush1.xpose.msra.mxu0 0.0
        %422 = vmatprep.subr.mxu0 0.0
        %423 = vmatpush1.xpose.msra.mxu0 0.0
        %424 = vmatprep.subr.mxu0 0.0
        %425 = vmatpush1.xpose.msra.mxu0 0.0
        %426 = vmatprep.subr.mxu0 0.0
        %427 = vmatpush1.xpose.msra.mxu0 0.0
        %428 = vmatprep.subr.mxu0 0.0
        %429 = vmatpush1.xpose.msra.mxu0 0.0
        %430 = vmatprep.subr.mxu0 0.0
        %431 = vmatpush1.xpose.msra.mxu0 0.0
        %432 = vmatprep.subr.mxu0 0.0
        %433 = vmatpush1.xpose.msra.mxu0 0.0
        %434 = vmatprep.subr.mxu0 0.0
        %435 = vmatpush1.xpose.msra.mxu0 0.0
        %436 = vmatprep.subr.mxu0 0.0
        %437 = vmatpush1.xpose.msra.mxu0 0.0
        %438 = vmatprep.subr.mxu0 0.0
        %439 = vmatpush1.xpose.msra.mxu0 0.0
        %440 = vmatprep.subr.mxu0 0.0
        %441 = vmatpush1.xpose.msra.mxu0 0.0
        %442 = vmatprep.subr.mxu0 0.0
        %443 = vmatpush1.xpose.msra.mxu0 0.0
        %444 = vmatprep.subr.mxu0 0.0
        %445 = vmatpush1.xpose.msra.mxu0 %v412
        %446 = vmatprep.subr.mxu0 0.0
        %447 = vmatpush2.xpose.msra.mxu0 0.0
        %448 = vmatprep.subr.mxu0 0.0
        %449 = vmatpush2.xpose.msra.mxu0 0.0
        %450 = vmatprep.subr.mxu0 0.0
        %451 = vmatpush2.xpose.msra.mxu0 0.0
        %452 = vmatprep.subr.mxu0 0.0
        %453 = vmatpush2.xpose.msra.mxu0 0.0
        %454 = vmatprep.subr.mxu0 0.0
        %455 = vmatpush2.xpose.msra.mxu0 0.0
        %456 = vmatprep.subr.mxu0 0.0
        %457 = vmatpush2.xpose.msra.mxu0 0.0
        %458 = vmatprep.subr.mxu0 0.0
        %459 = vmatpush2.xpose.msra.mxu0 0.0
        %460 = vmatprep.subr.mxu0 0.0
        %461 = vmatpush2.xpose.msra.mxu0 0.0
        %462 = vmatprep.subr.mxu0 0.0
        %463 = vmatpush2.xpose.msra.mxu0 0.0
        %464 = vmatprep.subr.mxu0 0.0
        %465 = vmatpush2.xpose.msra.mxu0 0.0
        %466 = vmatprep.subr.mxu0 0.0
        %467 = vmatpush2.xpose.msra.mxu0 0.0
        %468 = vmatprep.subr.mxu0 0.0
        %469 = vmatpush2.xpose.msra.mxu0 0.0
        %470 = vmatprep.subr.mxu0 0.0
        %471 = vmatpush2.xpose.msra.mxu0 0.0
        %472 = vmatprep.subr.mxu0 0.0
        %473 = vmatpush2.xpose.msra.mxu0 0.0
        %474 = vmatprep.subr.mxu0 0.0
        %475 = vmatpush2.xpose.msra.mxu0 0.0
        %476 = vmatprep.subr.mxu0 0.0
        %477 = vmatpush2.xpose.msra.mxu0 0.0
        %478 = vmatprep.mubr.f32.mxu0 0.0
        %479 = vmatmul.mubr.f32.gmra.mxu0 %v410
        %v480 = vpop.f32.mrf.mxu0
        %v481 = vadd.f32 0.0, %v480
        %v482 = vpop.f32.mrf.mxu0
        %483 = vdwg.mxu0
        %v484 = vsel %vm408, %v481, -inf
        %485 = vmax.xlane.f32.xlu0 %v484
        %v486 = vpop.xlane.xlu0 %485
        %v487 = vsub.f32 %v481, %v486
        %v488 = vmul.f32 %v487, 1.442695
        %v489 = vpow.pop %v488
        %v490 = vsel %vm408, %v489, 0.0
        %491 = vadd.xlane.f32.xlu0 %v490
        %v492 = vpop.xlane.xlu0 %491
        %v493 = vrcp.pop %v492
        %v494 = vmul.f32 %v489, %v493
        %495 = vrot.lane.b32.xlu0 %v394, 64
        %v496 = vpop.permute.xlu0 %495
        %v499 = vsel %vm408, %v494, 0
        %501 = vmatprep.subr.mxu0 0.0
        %502 = vmatpush1.msra.mxu0 0.0
        %503 = vmatprep.subr.mxu0 0.0
        %504 = vmatpush1.msra.mxu0 0.0
        %505 = vmatprep.subr.mxu0 0.0
        %506 = vmatpush1.msra.mxu0 0.0
        %507 = vmatprep.subr.mxu0 0.0
        %508 = vmatpush1.msra.mxu0 0.0
        %509 = vmatprep.subr.mxu0 0.0
        %510 = vmatpush1.msra.mxu0 0.0
        %511 = vmatprep.subr.mxu0 0.0
        %512 = vmatpush1.msra.mxu0 0.0
        %513 = vmatprep.subr.mxu0 0.0
        %514 = vmatpush1.msra.mxu0 0.0
        %515 = vmatprep.subr.mxu0 0.0
        %516 = vmatpush1.msra.mxu0 0.0
        %517 = vmatprep.subr.mxu0 0.0
        %518 = vmatpush1.msra.mxu0 0.0
        %519 = vmatprep.subr.mxu0 0.0
        %520 = vmatpush1.msra.mxu0 0.0
        %521 = vmatprep.subr.mxu0 0.0
        %522 = vmatpush1.msra.mxu0 0.0
        %523 = vmatprep.subr.mxu0 0.0
        %524 = vmatpush1.msra.mxu0 0.0
        %525 = vmatprep.subr.mxu0 0.0
        %526 = vmatpush1.msra.mxu0 0.0
        %527 = vmatprep.subr.mxu0 0.0
        %528 = vmatpush1.msra.mxu0 0.0
        %529 = vmatprep.subr.mxu0 0.0
        %530 = vmatpush1.msra.mxu0 0.0
        %531 = vmatprep.subr.mxu0 0.0
        %532 = vmatpush1.msra.mxu0 %v496
        %533 = vmatprep.subr.mxu0 0.0
        %534 = vmatpush2.msra.mxu0 0.0
        %535 = vmatprep.subr.mxu0 0.0
        %536 = vmatpush2.msra.mxu0 0.0
        %537 = vmatprep.subr.mxu0 0.0
        %538 = vmatpush2.msra.mxu0 0.0
        %539 = vmatprep.subr.mxu0 0.0
        %540 = vmatpush2.msra.mxu0 0.0
        %541 = vmatprep.subr.mxu0 0.0
        %542 = vmatpush2.msra.mxu0 0.0
        %543 = vmatprep.subr.mxu0 0.0
        %544 = vmatpush2.msra.mxu0 0.0
        %545 = vmatprep.subr.mxu0 0.0
        %546 = vmatpush2.msra.mxu0 0.0
        %547 = vmatprep.subr.mxu0 0.0
        %548 = vmatpush2.msra.mxu0 0.0
        %549 = vmatprep.subr.mxu0 0.0
        %550 = vmatpush2.msra.mxu0 0.0
        %551 = vmatprep.subr.mxu0 0.0
        %552 = vmatpush2.msra.mxu0 0.0
        %553 = vmatprep.subr.mxu0 0.0
        %554 = vmatpush2.msra.mxu0 0.0
        %555 = vmatprep.subr.mxu0 0.0
        %556 = vmatpush2.msra.mxu0 0.0
        %557 = vmatprep.subr.mxu0 0.0
        %558 = vmatpush2.msra.mxu0 0.0
        %559 = vmatprep.subr.mxu0 0.0
        %560 = vmatpush2.msra.mxu0 0.0
        %561 = vmatprep.subr.mxu0 0.0
        %562 = vmatpush2.msra.mxu0 0.0
        %563 = vmatprep.subr.mxu0 0.0
        %564 = vmatpush2.msra.mxu0 0.0
        %565 = vmatprep.mubr.f32.mxu0 0.0
        %566 = vmatmul.mubr.f32.gmra.mxu0 %v499
        %v567 = vpop.f32.mrf.mxu0
        %v568 = vadd.f32 0.0, %v567
        %v569 = vpop.f32.mrf.mxu0
        %570 = vdwg.mxu0
        %571 = vrot.lane.b32.xlu0 %v397, 120
        %v572 = vpop.permute.xlu0 %571
        %573 = vrot.lane.b32.xlu0 %v394, 88
        %v574 = vpop.permute.xlu0 %573
        %v575 = vsel %vm408, %v572, 0
        %v577 = vsel %vm408, %v574, 0
        %579 = vmatprep.subr.mxu0 0.0
        %580 = vmatpush1.xpose.msra.mxu0 0.0
        %581 = vmatprep.subr.mxu0 0.0
        %582 = vmatpush1.xpose.msra.mxu0 0.0
        %583 = vmatprep.subr.mxu0 0.0
        %584 = vmatpush1.xpose.msra.mxu0 0.0
        %585 = vmatprep.subr.mxu0 0.0
        %586 = vmatpush1.xpose.msra.mxu0 0.0
        %587 = vmatprep.subr.mxu0 0.0
        %588 = vmatpush1.xpose.msra.mxu0 0.0
        %589 = vmatprep.subr.mxu0 0.0
        %590 = vmatpush1.xpose.msra.mxu0 0.0
        %591 = vmatprep.subr.mxu0 0.0
        %592 = vmatpush1.xpose.msra.mxu0 0.0
        %593 = vmatprep.subr.mxu0 0.0
        %594 = vmatpush1.xpose.msra.mxu0 0.0
        %595 = vmatprep.subr.mxu0 0.0
        %596 = vmatpush1.xpose.msra.mxu0 0.0
        %597 = vmatprep.subr.mxu0 0.0
        %598 = vmatpush1.xpose.msra.mxu0 0.0
        %599 = vmatprep.subr.mxu0 0.0
        %600 = vmatpush1.xpose.msra.mxu0 0.0
        %601 = vmatprep.subr.mxu0 0.0
        %602 = vmatpush1.xpose.msra.mxu0 0.0
        %603 = vmatprep.subr.mxu0 0.0
        %604 = vmatpush1.xpose.msra.mxu0 0.0
        %605 = vmatprep.subr.mxu0 0.0
        %606 = vmatpush1.xpose.msra.mxu0 0.0
        %607 = vmatprep.subr.mxu0 0.0
        %608 = vmatpush1.xpose.msra.mxu0 0.0
        %609 = vmatprep.subr.mxu0 0.0
        %610 = vmatpush1.xpose.msra.mxu0 %v577
        %611 = vmatprep.subr.mxu0 0.0
        %612 = vmatpush2.xpose.msra.mxu0 0.0
        %613 = vmatprep.subr.mxu0 0.0
        %614 = vmatpush2.xpose.msra.mxu0 0.0
        %615 = vmatprep.subr.mxu0 0.0
        %616 = vmatpush2.xpose.msra.mxu0 0.0
        %617 = vmatprep.subr.mxu0 0.0
        %618 = vmatpush2.xpose.msra.mxu0 0.0
        %619 = vmatprep.subr.mxu0 0.0
        %620 = vmatpush2.xpose.msra.mxu0 0.0
        %621 = vmatprep.subr.mxu0 0.0
        %622 = vmatpush2.xpose.msra.mxu0 0.0
        %623 = vmatprep.subr.mxu0 0.0
        %624 = vmatpush2.xpose.msra.mxu0 0.0
        %625 = vmatprep.subr.mxu0 0.0
        %626 = vmatpush2.xpose.msra.mxu0 0.0
        %627 = vmatprep.subr.mxu0 0.0
        %628 = vmatpush2.xpose.msra.mxu0 0.0
        %629 = vmatprep.subr.mxu0 0.0
        %630 = vmatpush2.xpose.msra.mxu0 0.0
        %631 = vmatprep.subr.mxu0 0.0
        %632 = vmatpush2.xpose.msra.mxu0 0.0
        %633 = vmatprep.subr.mxu0 0.0
        %634 = vmatpush2.xpose.msra.mxu0 0.0
        %635 = vmatprep.subr.mxu0 0.0
        %636 = vmatpush2.xpose.msra.mxu0 0.0
        %637 = vmatprep.subr.mxu0 0.0
        %638 = vmatpush2.xpose.msra.mxu0 0.0
        %639 = vmatprep.subr.mxu0 0.0
        %640 = vmatpush2.xpose.msra.mxu0 0.0
        %641 = vmatprep.subr.mxu0 0.0
        %642 = vmatpush2.xpose.msra.mxu0 0.0
        %643 = vmatprep.mubr.f32.mxu0 0.0
        %644 = vmatmul.mubr.f32.gmra.mxu0 %v575
        %v645 = vpop.f32.mrf.mxu0
        %v646 = vadd.f32 0.0, %v645
        %v647 = vpop.f32.mrf.mxu0
        %648 = vdwg.mxu0
        %v649 = vsel %vm408, %v646, -inf
        %650 = vmax.xlane.f32.xlu0 %v649
        %v651 = vpop.xlane.xlu0 %650
        %v652 = vsub.f32 %v646, %v651
        %v653 = vmul.f32 %v652, 1.442695
        %v654 = vpow.pop %v653
        %v655 = vsel %vm408, %v654, 0.0
        %656 = vadd.xlane.f32.xlu0 %v655
        %v657 = vpop.xlane.xlu0 %656
        %v658 = vrcp.pop %v657
        %v659 = vmul.f32 %v654, %v658
        %660 = vrot.lane.b32.xlu0 %v394, 56
        %v661 = vpop.permute.xlu0 %660
        %v664 = vsel %vm408, %v659, 0
        %666 = vmatprep.subr.mxu0 0.0
        %667 = vmatpush1.msra.mxu0 0.0
        %668 = vmatprep.subr.mxu0 0.0
        %669 = vmatpush1.msra.mxu0 0.0
        %670 = vmatprep.subr.mxu0 0.0
        %671 = vmatpush1.msra.mxu0 0.0
        %672 = vmatprep.subr.mxu0 0.0
        %673 = vmatpush1.msra.mxu0 0.0
        %674 = vmatprep.subr.mxu0 0.0
        %675 = vmatpush1.msra.mxu0 0.0
        %676 = vmatprep.subr.mxu0 0.0
        %677 = vmatpush1.msra.mxu0 0.0
        %678 = vmatprep.subr.mxu0 0.0
        %679 = vmatpush1.msra.mxu0 0.0
        %680 = vmatprep.subr.mxu0 0.0
        %681 = vmatpush1.msra.mxu0 0.0
        %682 = vmatprep.subr.mxu0 0.0
        %683 = vmatpush1.msra.mxu0 0.0
        %684 = vmatprep.subr.mxu0 0.0
        %685 = vmatpush1.msra.mxu0 0.0
        %686 = vmatprep.subr.mxu0 0.0
        %687 = vmatpush1.msra.mxu0 0.0
        %688 = vmatprep.subr.mxu0 0.0
        %689 = vmatpush1.msra.mxu0 0.0
        %690 = vmatprep.subr.mxu0 0.0
        %691 = vmatpush1.msra.mxu0 0.0
        %692 = vmatprep.subr.mxu0 0.0
        %693 = vmatpush1.msra.mxu0 0.0
        %694 = vmatprep.subr.mxu0 0.0
        %695 = vmatpush1.msra.mxu0 0.0
        %696 = vmatprep.subr.mxu0 0.0
        %697 = vmatpush1.msra.mxu0 %v661
        %698 = vmatprep.subr.mxu0 0.0
        %699 = vmatpush2.msra.mxu0 0.0
        %700 = vmatprep.subr.mxu0 0.0
        %701 = vmatpush2.msra.mxu0 0.0
        %702 = vmatprep.subr.mxu0 0.0
        %703 = vmatpush2.msra.mxu0 0.0
        %704 = vmatprep.subr.mxu0 0.0
        %705 = vmatpush2.msra.mxu0 0.0
        %706 = vmatprep.subr.mxu0 0.0
        %707 = vmatpush2.msra.mxu0 0.0
        %708 = vmatprep.subr.mxu0 0.0
        %709 = vmatpush2.msra.mxu0 0.0
        %710 = vmatprep.subr.mxu0 0.0
        %711 = vmatpush2.msra.mxu0 0.0
        %712 = vmatprep.subr.mxu0 0.0
        %713 = vmatpush2.msra.mxu0 0.0
        %714 = vmatprep.subr.mxu0 0.0
        %715 = vmatpush2.msra.mxu0 0.0
        %716 = vmatprep.subr.mxu0 0.0
        %717 = vmatpush2.msra.mxu0 0.0
        %718 = vmatprep.subr.mxu0 0.0
        %719 = vmatpush2.msra.mxu0 0.0
        %720 = vmatprep.subr.mxu0 0.0
        %721 = vmatpush2.msra.mxu0 0.0
        %722 = vmatprep.subr.mxu0 0.0
        %723 = vmatpush2.msra.mxu0 0.0
        %724 = vmatprep.subr.mxu0 0.0
        %725 = vmatpush2.msra.mxu0 0.0
        %726 = vmatprep.subr.mxu0 0.0
        %727 = vmatpush2.msra.mxu0 0.0
        %728 = vmatprep.subr.mxu0 0.0
        %729 = vmatpush2.msra.mxu0 0.0
        %730 = vmatprep.mubr.f32.mxu0 0.0
        %731 = vmatmul.mubr.f32.gmra.mxu0 %v664
        %v732 = vpop.f32.mrf.mxu0
        %v733 = vadd.f32 0.0, %v732
        %v734 = vpop.f32.mrf.mxu0
        %735 = vdwg.mxu0
        %v737 = vsel %vm408, %v733, 0
        %739 = vmatprep.subr.mxu0 0.0
        %740 = vmatpush1.msra.mxu0 0.0
        %741 = vmatprep.subr.mxu0 0.0
        %742 = vmatpush1.msra.mxu0 0.0
        %743 = vmatprep.subr.mxu0 0.0
        %744 = vmatpush1.msra.mxu0 0.0
        %745 = vmatprep.subr.mxu0 0.0
        %746 = vmatpush1.msra.mxu0 0.0
        %747 = vmatprep.subr.mxu0 0.0
        %748 = vmatpush1.msra.mxu0 0.0
        %749 = vmatprep.subr.mxu0 0.0
        %750 = vmatpush1.msra.mxu0 0.0
        %751 = vmatprep.subr.mxu0 0.0
        %752 = vmatpush1.msra.mxu0 0.0
        %753 = vmatprep.subr.mxu0 0.0
        %754 = vmatpush1.msra.mxu0 0.0
        %755 = vmatprep.subr.mxu0 0.0
        %756 = vmatpush1.msra.mxu0 0.0
        %757 = vmatprep.subr.mxu0 0.0
        %758 = vmatpush1.msra.mxu0 0.0
        %759 = vmatprep.subr.mxu0 0.0
        %760 = vmatpush1.msra.mxu0 0.0
        %761 = vmatprep.subr.mxu0 0.0
        %762 = vmatpush1.msra.mxu0 0.0
        %763 = vmatprep.subr.mxu0 0.0
        %764 = vmatpush1.msra.mxu0 0.0
        %765 = vmatprep.subr.mxu0 0.0
        %766 = vmatpush1.msra.mxu0 0.0
        %767 = vmatprep.subr.mxu0 0.0
        %768 = vmatpush1.msra.mxu0 0.0
        %769 = vmatprep.subr.mxu0 0.0
        %770 = vmatpush1.msra.mxu0 %v399
        %771 = vmatprep.subr.mxu0 0.0
        %772 = vmatpush2.msra.mxu0 0.0
        %773 = vmatprep.subr.mxu0 0.0
        %774 = vmatpush2.msra.mxu0 0.0
        %775 = vmatprep.subr.mxu0 0.0
        %776 = vmatpush2.msra.mxu0 0.0
        %777 = vmatprep.subr.mxu0 0.0
        %778 = vmatpush2.msra.mxu0 0.0
        %779 = vmatprep.subr.mxu0 0.0
        %780 = vmatpush2.msra.mxu0 0.0
        %781 = vmatprep.subr.mxu0 0.0
        %782 = vmatpush2.msra.mxu0 0.0
        %783 = vmatprep.subr.mxu0 0.0
        %784 = vmatpush2.msra.mxu0 0.0
        %785 = vmatprep.subr.mxu0 0.0
        %786 = vmatpush2.msra.mxu0 0.0
        %787 = vmatprep.subr.mxu0 0.0
        %788 = vmatpush2.msra.mxu0 0.0
        %789 = vmatprep.subr.mxu0 0.0
        %790 = vmatpush2.msra.mxu0 0.0
        %791 = vmatprep.subr.mxu0 0.0
        %792 = vmatpush2.msra.mxu0 0.0
        %793 = vmatprep.subr.mxu0 0.0
        %794 = vmatpush2.msra.mxu0 0.0
        %795 = vmatprep.subr.mxu0 0.0
        %796 = vmatpush2.msra.mxu0 0.0
        %797 = vmatprep.subr.mxu0 0.0
        %798 = vmatpush2.msra.mxu0 0.0
        %799 = vmatprep.subr.mxu0 0.0
        %800 = vmatpush2.msra.mxu0 0.0
        %801 = vmatprep.subr.mxu0 0.0
        %802 = vmatpush2.msra.mxu0 0.0
        %803 = vmatprep.mubr.f32.mxu0 0.0
        %804 = vmatmul.mubr.f32.gmra.mxu0 %v737
        %v805 = vpop.f32.mrf.mxu0
        %v806 = vadd.f32 0.0, %v805
        %v807 = vpop.f32.mrf.mxu0
        %808 = vdwg.mxu0
        %v810 = vsel %vm408, %v568, 0
        %812 = vmatprep.subr.mxu0 0.0
        %813 = vmatpush1.msra.mxu0 0.0
        %814 = vmatprep.subr.mxu0 0.0
        %815 = vmatpush1.msra.mxu0 0.0
        %816 = vmatprep.subr.mxu0 0.0
        %817 = vmatpush1.msra.mxu0 0.0
        %818 = vmatprep.subr.mxu0 0.0
        %819 = vmatpush1.msra.mxu0 0.0
        %820 = vmatprep.subr.mxu0 0.0
        %821 = vmatpush1.msra.mxu0 0.0
        %822 = vmatprep.subr.mxu0 0.0
        %823 = vmatpush1.msra.mxu0 0.0
        %824 = vmatprep.subr.mxu0 0.0
        %825 = vmatpush1.msra.mxu0 0.0
        %826 = vmatprep.subr.mxu0 0.0
        %827 = vmatpush1.msra.mxu0 0.0
        %828 = vmatprep.subr.mxu0 0.0
        %829 = vmatpush1.msra.mxu0 0.0
        %830 = vmatprep.subr.mxu0 0.0
        %831 = vmatpush1.msra.mxu0 0.0
        %832 = vmatprep.subr.mxu0 0.0
        %833 = vmatpush1.msra.mxu0 0.0
        %834 = vmatprep.subr.mxu0 0.0
        %835 = vmatpush1.msra.mxu0 0.0
        %836 = vmatprep.subr.mxu0 0.0
        %837 = vmatpush1.msra.mxu0 0.0
        %838 = vmatprep.subr.mxu0 0.0
        %839 = vmatpush1.msra.mxu0 0.0
        %840 = vmatprep.subr.mxu0 0.0
        %841 = vmatpush1.msra.mxu0 0.0
        %842 = vmatprep.subr.mxu0 0.0
        %843 = vmatpush1.msra.mxu0 %v398
        %844 = vmatprep.subr.mxu0 0.0
        %845 = vmatpush2.msra.mxu0 0.0
        %846 = vmatprep.subr.mxu0 0.0
        %847 = vmatpush2.msra.mxu0 0.0
        %848 = vmatprep.subr.mxu0 0.0
        %849 = vmatpush2.msra.mxu0 0.0
        %850 = vmatprep.subr.mxu0 0.0
        %851 = vmatpush2.msra.mxu0 0.0
        %852 = vmatprep.subr.mxu0 0.0
        %853 = vmatpush2.msra.mxu0 0.0
        %854 = vmatprep.subr.mxu0 0.0
        %855 = vmatpush2.msra.mxu0 0.0
        %856 = vmatprep.subr.mxu0 0.0
        %857 = vmatpush2.msra.mxu0 0.0
        %858 = vmatprep.subr.mxu0 0.0
        %859 = vmatpush2.msra.mxu0 0.0
        %860 = vmatprep.subr.mxu0 0.0
        %861 = vmatpush2.msra.mxu0 0.0
        %862 = vmatprep.subr.mxu0 0.0
        %863 = vmatpush2.msra.mxu0 0.0
        %864 = vmatprep.subr.mxu0 0.0
        %865 = vmatpush2.msra.mxu0 0.0
        %866 = vmatprep.subr.mxu0 0.0
        %867 = vmatpush2.msra.mxu0 0.0
        %868 = vmatprep.subr.mxu0 0.0
        %869 = vmatpush2.msra.mxu0 0.0
        %870 = vmatprep.subr.mxu0 0.0
        %871 = vmatpush2.msra.mxu0 0.0
        %872 = vmatprep.subr.mxu0 0.0
        %873 = vmatpush2.msra.mxu0 0.0
        %874 = vmatprep.subr.mxu0 0.0
        %875 = vmatpush2.msra.mxu0 0.0
        %876 = vmatprep.mubr.f32.mxu0 0.0
        %877 = vmatmul.mubr.f32.gmra.mxu0 %v810
        %v878 = vpop.f32.mrf.mxu0
        %v879 = vadd.f32 %v806, %v878
        %v880 = vpop.f32.mrf.mxu0
        %881 = vdwg.mxu0
        %882 = vrot.lane.b32.xlu0 %v397, 112
        %v883 = vpop.permute.xlu0 %882
        %884 = vrot.lane.b32.xlu0 %v394, 80
        %v885 = vpop.permute.xlu0 %884
        %v886 = vsel %vm408, %v883, 0
        %v888 = vsel %vm408, %v885, 0
        %890 = vmatprep.subr.mxu0 0.0
        %891 = vmatpush1.xpose.msra.mxu0 0.0
        %892 = vmatprep.subr.mxu0 0.0
        %893 = vmatpush1.xpose.msra.mxu0 0.0
        %894 = vmatprep.subr.mxu0 0.0
        %895 = vmatpush1.xpose.msra.mxu0 0.0
        %896 = vmatprep.subr.mxu0 0.0
        %897 = vmatpush1.xpose.msra.mxu0 0.0
        %898 = vmatprep.subr.mxu0 0.0
        %899 = vmatpush1.xpose.msra.mxu0 0.0
        %900 = vmatprep.subr.mxu0 0.0
        %901 = vmatpush1.xpose.msra.mxu0 0.0
        %902 = vmatprep.subr.mxu0 0.0
        %903 = vmatpush1.xpose.msra.mxu0 0.0
        %904 = vmatprep.subr.mxu0 0.0
        %905 = vmatpush1.xpose.msra.mxu0 0.0
        %906 = vmatprep.subr.mxu0 0.0
        %907 = vmatpush1.xpose.msra.mxu0 0.0
        %908 = vmatprep.subr.mxu0 0.0
        %909 = vmatpush1.xpose.msra.mxu0 0.0
        %910 = vmatprep.subr.mxu0 0.0
        %911 = vmatpush1.xpose.msra.mxu0 0.0
        %912 = vmatprep.subr.mxu0 0.0
        %913 = vmatpush1.xpose.msra.mxu0 0.0
        %914 = vmatprep.subr.mxu0 0.0
        %915 = vmatpush1.xpose.msra.mxu0 0.0
        %916 = vmatprep.subr.mxu0 0.0
        %917 = vmatpush1.xpose.msra.mxu0 0.0
        %918 = vmatprep.subr.mxu0 0.0
        %919 = vmatpush1.xpose.msra.mxu0 0.0
        %920 = vmatprep.subr.mxu0 0.0
        %921 = vmatpush1.xpose.msra.mxu0 %v888
        %922 = vmatprep.subr.mxu0 0.0
        %923 = vmatpush2.xpose.msra.mxu0 0.0
        %924 = vmatprep.subr.mxu0 0.0
        %925 = vmatpush2.xpose.msra.mxu0 0.0
        %926 = vmatprep.subr.mxu0 0.0
        %927 = vmatpush2.xpose.msra.mxu0 0.0
        %928 = vmatprep.subr.mxu0 0.0
        %929 = vmatpush2.xpose.msra.mxu0 0.0
        %930 = vmatprep.subr.mxu0 0.0
        %931 = vmatpush2.xpose.msra.mxu0 0.0
        %932 = vmatprep.subr.mxu0 0.0
        %933 = vmatpush2.xpose.msra.mxu0 0.0
        %934 = vmatprep.subr.mxu0 0.0
        %935 = vmatpush2.xpose.msra.mxu0 0.0
        %936 = vmatprep.subr.mxu0 0.0
        %937 = vmatpush2.xpose.msra.mxu0 0.0
        %938 = vmatprep.subr.mxu0 0.0
        %939 = vmatpush2.xpose.msra.mxu0 0.0
        %940 = vmatprep.subr.mxu0 0.0
        %941 = vmatpush2.xpose.msra.mxu0 0.0
        %942 = vmatprep.subr.mxu0 0.0
        %943 = vmatpush2.xpose.msra.mxu0 0.0
        %944 = vmatprep.subr.mxu0 0.0
        %945 = vmatpush2.xpose.msra.mxu0 0.0
        %946 = vmatprep.subr.mxu0 0.0
        %947 = vmatpush2.xpose.msra.mxu0 0.0
        %948 = vmatprep.subr.mxu0 0.0
        %949 = vmatpush2.xpose.msra.mxu0 0.0
        %950 = vmatprep.subr.mxu0 0.0
        %951 = vmatpush2.xpose.msra.mxu0 0.0
        %952 = vmatprep.subr.mxu0 0.0
        %953 = vmatpush2.xpose.msra.mxu0 0.0
        %954 = vmatprep.mubr.f32.mxu0 0.0
        %955 = vmatmul.mubr.f32.gmra.mxu0 %v886
        %v956 = vpop.f32.mrf.mxu0
        %v957 = vadd.f32 0.0, %v956
        %v958 = vpop.f32.mrf.mxu0
        %959 = vdwg.mxu0
        %v960 = vsel %vm408, %v957, -inf
        %961 = vmax.xlane.f32.xlu0 %v960
        %v962 = vpop.xlane.xlu0 %961
        %v963 = vsub.f32 %v957, %v962
        %v964 = vmul.f32 %v963, 1.442695
        %v965 = vpow.pop %v964
        %v966 = vsel %vm408, %v965, 0.0
        %967 = vadd.xlane.f32.xlu0 %v966
        %v968 = vpop.xlane.xlu0 %967
        %v969 = vrcp.pop %v968
        %v970 = vmul.f32 %v965, %v969
        %971 = vrot.lane.b32.xlu0 %v394, 48
        %v972 = vpop.permute.xlu0 %971
        %v975 = vsel %vm408, %v970, 0
        %977 = vmatprep.subr.mxu0 0.0
        %978 = vmatpush1.msra.mxu0 0.0
        %979 = vmatprep.subr.mxu0 0.0
        %980 = vmatpush1.msra.mxu0 0.0
        %981 = vmatprep.subr.mxu0 0.0
        %982 = vmatpush1.msra.mxu0 0.0
        %983 = vmatprep.subr.mxu0 0.0
        %984 = vmatpush1.msra.mxu0 0.0
        %985 = vmatprep.subr.mxu0 0.0
        %986 = vmatpush1.msra.mxu0 0.0
        %987 = vmatprep.subr.mxu0 0.0
        %988 = vmatpush1.msra.mxu0 0.0
        %989 = vmatprep.subr.mxu0 0.0
        %990 = vmatpush1.msra.mxu0 0.0
        %991 = vmatprep.subr.mxu0 0.0
        %992 = vmatpush1.msra.mxu0 0.0
        %993 = vmatprep.subr.mxu0 0.0
        %994 = vmatpush1.msra.mxu0 0.0
        %995 = vmatprep.subr.mxu0 0.0
        %996 = vmatpush1.msra.mxu0 0.0
        %997 = vmatprep.subr.mxu0 0.0
        %998 = vmatpush1.msra.mxu0 0.0
        %999 = vmatprep.subr.mxu0 0.0
        %1000 = vmatpush1.msra.mxu0 0.0
        %1001 = vmatprep.subr.mxu0 0.0
        %1002 = vmatpush1.msra.mxu0 0.0
        %1003 = vmatprep.subr.mxu0 0.0
        %1004 = vmatpush1.msra.mxu0 0.0
        %1005 = vmatprep.subr.mxu0 0.0
        %1006 = vmatpush1.msra.mxu0 0.0
        %1007 = vmatprep.subr.mxu0 0.0
        %1008 = vmatpush1.msra.mxu0 %v972
        %1009 = vmatprep.subr.mxu0 0.0
        %1010 = vmatpush2.msra.mxu0 0.0
        %1011 = vmatprep.subr.mxu0 0.0
        %1012 = vmatpush2.msra.mxu0 0.0
        %1013 = vmatprep.subr.mxu0 0.0
        %1014 = vmatpush2.msra.mxu0 0.0
        %1015 = vmatprep.subr.mxu0 0.0
        %1016 = vmatpush2.msra.mxu0 0.0
        %1017 = vmatprep.subr.mxu0 0.0
        %1018 = vmatpush2.msra.mxu0 0.0
        %1019 = vmatprep.subr.mxu0 0.0
        %1020 = vmatpush2.msra.mxu0 0.0
        %1021 = vmatprep.subr.mxu0 0.0
        %1022 = vmatpush2.msra.mxu0 0.0
        %1023 = vmatprep.subr.mxu0 0.0
        %1024 = vmatpush2.msra.mxu0 0.0
        %1025 = vmatprep.subr.mxu0 0.0
        %1026 = vmatpush2.msra.mxu0 0.0
        %1027 = vmatprep.subr.mxu0 0.0
        %1028 = vmatpush2.msra.mxu0 0.0
        %1029 = vmatprep.subr.mxu0 0.0
        %1030 = vmatpush2.msra.mxu0 0.0
        %1031 = vmatprep.subr.mxu0 0.0
        %1032 = vmatpush2.msra.mxu0 0.0
        %1033 = vmatprep.subr.mxu0 0.0
        %1034 = vmatpush2.msra.mxu0 0.0
        %1035 = vmatprep.subr.mxu0 0.0
        %1036 = vmatpush2.msra.mxu0 0.0
        %1037 = vmatprep.subr.mxu0 0.0
        %1038 = vmatpush2.msra.mxu0 0.0
        %1039 = vmatprep.subr.mxu0 0.0
        %1040 = vmatpush2.msra.mxu0 0.0
        %1041 = vmatprep.mubr.f32.mxu0 0.0
        %1042 = vmatmul.mubr.f32.gmra.mxu0 %v975
        %v1043 = vpop.f32.mrf.mxu0
        %v1044 = vadd.f32 0.0, %v1043
        %v1045 = vpop.f32.mrf.mxu0
        %1046 = vdwg.mxu0
        %v1048 = vsel %vm408, %v1044, 0
        %1050 = vmatprep.subr.mxu0 0.0
        %1051 = vmatpush1.msra.mxu0 0.0
        %1052 = vmatprep.subr.mxu0 0.0
        %1053 = vmatpush1.msra.mxu0 0.0
        %1054 = vmatprep.subr.mxu0 0.0
        %1055 = vmatpush1.msra.mxu0 0.0
        %1056 = vmatprep.subr.mxu0 0.0
        %1057 = vmatpush1.msra.mxu0 0.0
        %1058 = vmatprep.subr.mxu0 0.0
        %1059 = vmatpush1.msra.mxu0 0.0
        %1060 = vmatprep.subr.mxu0 0.0
        %1061 = vmatpush1.msra.mxu0 0.0
        %1062 = vmatprep.subr.mxu0 0.0
        %1063 = vmatpush1.msra.mxu0 0.0
        %1064 = vmatprep.subr.mxu0 0.0
        %1065 = vmatpush1.msra.mxu0 0.0
        %1066 = vmatprep.subr.mxu0 0.0
        %1067 = vmatpush1.msra.mxu0 0.0
        %1068 = vmatprep.subr.mxu0 0.0
        %1069 = vmatpush1.msra.mxu0 0.0
        %1070 = vmatprep.subr.mxu0 0.0
        %1071 = vmatpush1.msra.mxu0 0.0
        %1072 = vmatprep.subr.mxu0 0.0
        %1073 = vmatpush1.msra.mxu0 0.0
        %1074 = vmatprep.subr.mxu0 0.0
        %1075 = vmatpush1.msra.mxu0 0.0
        %1076 = vmatprep.subr.mxu0 0.0
        %1077 = vmatpush1.msra.mxu0 0.0
        %1078 = vmatprep.subr.mxu0 0.0
        %1079 = vmatpush1.msra.mxu0 0.0
        %1080 = vmatprep.subr.mxu0 0.0
        %1081 = vmatpush1.msra.mxu0 %v400
        %1082 = vmatprep.subr.mxu0 0.0
        %1083 = vmatpush2.msra.mxu0 0.0
        %1084 = vmatprep.subr.mxu0 0.0
        %1085 = vmatpush2.msra.mxu0 0.0
        %1086 = vmatprep.subr.mxu0 0.0
        %1087 = vmatpush2.msra.mxu0 0.0
        %1088 = vmatprep.subr.mxu0 0.0
        %1089 = vmatpush2.msra.mxu0 0.0
        %1090 = vmatprep.subr.mxu0 0.0
        %1091 = vmatpush2.msra.mxu0 0.0
        %1092 = vmatprep.subr.mxu0 0.0
        %1093 = vmatpush2.msra.mxu0 0.0
        %1094 = vmatprep.subr.mxu0 0.0
        %1095 = vmatpush2.msra.mxu0 0.0
        %1096 = vmatprep.subr.mxu0 0.0
        %1097 = vmatpush2.msra.mxu0 0.0
        %1098 = vmatprep.subr.mxu0 0.0
        %1099 = vmatpush2.msra.mxu0 0.0
        %1100 = vmatprep.subr.mxu0 0.0
        %1101 = vmatpush2.msra.mxu0 0.0
        %1102 = vmatprep.subr.mxu0 0.0
        %1103 = vmatpush2.msra.mxu0 0.0
        %1104 = vmatprep.subr.mxu0 0.0
        %1105 = vmatpush2.msra.mxu0 0.0
        %1106 = vmatprep.subr.mxu0 0.0
        %1107 = vmatpush2.msra.mxu0 0.0
        %1108 = vmatprep.subr.mxu0 0.0
        %1109 = vmatpush2.msra.mxu0 0.0
        %1110 = vmatprep.subr.mxu0 0.0
        %1111 = vmatpush2.msra.mxu0 0.0
        %1112 = vmatprep.subr.mxu0 0.0
        %1113 = vmatpush2.msra.mxu0 0.0
        %1114 = vmatprep.mubr.f32.mxu0 0.0
        %1115 = vmatmul.mubr.f32.gmra.mxu0 %v1048
        %v1116 = vpop.f32.mrf.mxu0
        %v1117 = vadd.f32 0.0, %v1116
        %v1118 = vpop.f32.mrf.mxu0
        %1119 = vdwg.mxu0
        %v1120 = vadd.f32 %v879, %v1117
        %1121 = vrot.lane.b32.xlu0 %v397, 104
        %v1122 = vpop.permute.xlu0 %1121
        %1123 = vrot.lane.b32.xlu0 %v394, 72
        %v1124 = vpop.permute.xlu0 %1123
        %v1125 = vsel %vm408, %v1122, 0
        %v1127 = vsel %vm408, %v1124, 0
        %1129 = vmatprep.subr.mxu0 0.0
        %1130 = vmatpush1.xpose.msra.mxu0 0.0
        %1131 = vmatprep.subr.mxu0 0.0
        %1132 = vmatpush1.xpose.msra.mxu0 0.0
        %1133 = vmatprep.subr.mxu0 0.0
        %1134 = vmatpush1.xpose.msra.mxu0 0.0
        %1135 = vmatprep.subr.mxu0 0.0
        %1136 = vmatpush1.xpose.msra.mxu0 0.0
        %1137 = vmatprep.subr.mxu0 0.0
        %1138 = vmatpush1.xpose.msra.mxu0 0.0
        %1139 = vmatprep.subr.mxu0 0.0
        %1140 = vmatpush1.xpose.msra.mxu0 0.0
        %1141 = vmatprep.subr.mxu0 0.0
        %1142 = vmatpush1.xpose.msra.mxu0 0.0
        %1143 = vmatprep.subr.mxu0 0.0
        %1144 = vmatpush1.xpose.msra.mxu0 0.0
        %1145 = vmatprep.subr.mxu0 0.0
        %1146 = vmatpush1.xpose.msra.mxu0 0.0
        %1147 = vmatprep.subr.mxu0 0.0
        %1148 = vmatpush1.xpose.msra.mxu0 0.0
        %1149 = vmatprep.subr.mxu0 0.0
        %1150 = vmatpush1.xpose.msra.mxu0 0.0
        %1151 = vmatprep.subr.mxu0 0.0
        %1152 = vmatpush1.xpose.msra.mxu0 0.0
        %1153 = vmatprep.subr.mxu0 0.0
        %1154 = vmatpush1.xpose.msra.mxu0 0.0
        %1155 = vmatprep.subr.mxu0 0.0
        %1156 = vmatpush1.xpose.msra.mxu0 0.0
        %1157 = vmatprep.subr.mxu0 0.0
        %1158 = vmatpush1.xpose.msra.mxu0 0.0
        %1159 = vmatprep.subr.mxu0 0.0
        %1160 = vmatpush1.xpose.msra.mxu0 %v1127
        %1161 = vmatprep.subr.mxu0 0.0
        %1162 = vmatpush2.xpose.msra.mxu0 0.0
        %1163 = vmatprep.subr.mxu0 0.0
        %1164 = vmatpush2.xpose.msra.mxu0 0.0
        %1165 = vmatprep.subr.mxu0 0.0
        %1166 = vmatpush2.xpose.msra.mxu0 0.0
        %1167 = vmatprep.subr.mxu0 0.0
        %1168 = vmatpush2.xpose.msra.mxu0 0.0
        %1169 = vmatprep.subr.mxu0 0.0
        %1170 = vmatpush2.xpose.msra.mxu0 0.0
        %1171 = vmatprep.subr.mxu0 0.0
        %1172 = vmatpush2.xpose.msra.mxu0 0.0
        %1173 = vmatprep.subr.mxu0 0.0
        %1174 = vmatpush2.xpose.msra.mxu0 0.0
        %1175 = vmatprep.subr.mxu0 0.0
        %1176 = vmatpush2.xpose.msra.mxu0 0.0
        %1177 = vmatprep.subr.mxu0 0.0
        %1178 = vmatpush2.xpose.msra.mxu0 0.0
        %1179 = vmatprep.subr.mxu0 0.0
        %1180 = vmatpush2.xpose.msra.mxu0 0.0
        %1181 = vmatprep.subr.mxu0 0.0
        %1182 = vmatpush2.xpose.msra.mxu0 0.0
        %1183 = vmatprep.subr.mxu0 0.0
        %1184 = vmatpush2.xpose.msra.mxu0 0.0
        %1185 = vmatprep.subr.mxu0 0.0
        %1186 = vmatpush2.xpose.msra.mxu0 0.0
        %1187 = vmatprep.subr.mxu0 0.0
        %1188 = vmatpush2.xpose.msra.mxu0 0.0
        %1189 = vmatprep.subr.mxu0 0.0
        %1190 = vmatpush2.xpose.msra.mxu0 0.0
        %1191 = vmatprep.subr.mxu0 0.0
        %1192 = vmatpush2.xpose.msra.mxu0 0.0
        %1193 = vmatprep.mubr.f32.mxu0 0.0
        %1194 = vmatmul.mubr.f32.gmra.mxu0 %v1125
        %v1195 = vpop.f32.mrf.mxu0
        %v1196 = vadd.f32 0.0, %v1195
        %v1197 = vpop.f32.mrf.mxu0
        %1198 = vdwg.mxu0
        %v1199 = vsel %vm408, %v1196, -inf
        %1200 = vmax.xlane.f32.xlu0 %v1199
        %v1201 = vpop.xlane.xlu0 %1200
        %v1202 = vsub.f32 %v1196, %v1201
        %v1203 = vmul.f32 %v1202, 1.442695
        %v1204 = vpow.pop %v1203
        %v1205 = vsel %vm408, %v1204, 0.0
        %1206 = vadd.xlane.f32.xlu0 %v1205
        %v1207 = vpop.xlane.xlu0 %1206
        %v1208 = vrcp.pop %v1207
        %v1209 = vmul.f32 %v1204, %v1208
        %1210 = vrot.lane.b32.xlu0 %v394, 40
        %v1211 = vpop.permute.xlu0 %1210
        %v1214 = vsel %vm408, %v1209, 0
        %1216 = vmatprep.subr.mxu0 0.0
        %1217 = vmatpush1.msra.mxu0 0.0
        %1218 = vmatprep.subr.mxu0 0.0
        %1219 = vmatpush1.msra.mxu0 0.0
        %1220 = vmatprep.subr.mxu0 0.0
        %1221 = vmatpush1.msra.mxu0 0.0
        %1222 = vmatprep.subr.mxu0 0.0
        %1223 = vmatpush1.msra.mxu0 0.0
        %1224 = vmatprep.subr.mxu0 0.0
        %1225 = vmatpush1.msra.mxu0 0.0
        %1226 = vmatprep.subr.mxu0 0.0
        %1227 = vmatpush1.msra.mxu0 0.0
        %1228 = vmatprep.subr.mxu0 0.0
        %1229 = vmatpush1.msra.mxu0 0.0
        %1230 = vmatprep.subr.mxu0 0.0
        %1231 = vmatpush1.msra.mxu0 0.0
        %1232 = vmatprep.subr.mxu0 0.0
        %1233 = vmatpush1.msra.mxu0 0.0
        %1234 = vmatprep.subr.mxu0 0.0
        %1235 = vmatpush1.msra.mxu0 0.0
        %1236 = vmatprep.subr.mxu0 0.0
        %1237 = vmatpush1.msra.mxu0 0.0
        %1238 = vmatprep.subr.mxu0 0.0
        %1239 = vmatpush1.msra.mxu0 0.0
        %1240 = vmatprep.subr.mxu0 0.0
        %1241 = vmatpush1.msra.mxu0 0.0
        %1242 = vmatprep.subr.mxu0 0.0
        %1243 = vmatpush1.msra.mxu0 0.0
        %1244 = vmatprep.subr.mxu0 0.0
        %1245 = vmatpush1.msra.mxu0 0.0
        %1246 = vmatprep.subr.mxu0 0.0
        %1247 = vmatpush1.msra.mxu0 %v1211
        %1248 = vmatprep.subr.mxu0 0.0
        %1249 = vmatpush2.msra.mxu0 0.0
        %1250 = vmatprep.subr.mxu0 0.0
        %1251 = vmatpush2.msra.mxu0 0.0
        %1252 = vmatprep.subr.mxu0 0.0
        %1253 = vmatpush2.msra.mxu0 0.0
        %1254 = vmatprep.subr.mxu0 0.0
        %1255 = vmatpush2.msra.mxu0 0.0
        %1256 = vmatprep.subr.mxu0 0.0
        %1257 = vmatpush2.msra.mxu0 0.0
        %1258 = vmatprep.subr.mxu0 0.0
        %1259 = vmatpush2.msra.mxu0 0.0
        %1260 = vmatprep.subr.mxu0 0.0
        %1261 = vmatpush2.msra.mxu0 0.0
        %1262 = vmatprep.subr.mxu0 0.0
        %1263 = vmatpush2.msra.mxu0 0.0
        %1264 = vmatprep.subr.mxu0 0.0
        %1265 = vmatpush2.msra.mxu0 0.0
        %1266 = vmatprep.subr.mxu0 0.0
        %1267 = vmatpush2.msra.mxu0 0.0
        %1268 = vmatprep.subr.mxu0 0.0
        %1269 = vmatpush2.msra.mxu0 0.0
        %1270 = vmatprep.subr.mxu0 0.0
        %1271 = vmatpush2.msra.mxu0 0.0
        %1272 = vmatprep.subr.mxu0 0.0
        %1273 = vmatpush2.msra.mxu0 0.0
        %1274 = vmatprep.subr.mxu0 0.0
        %1275 = vmatpush2.msra.mxu0 0.0
        %1276 = vmatprep.subr.mxu0 0.0
        %1277 = vmatpush2.msra.mxu0 0.0
        %1278 = vmatprep.subr.mxu0 0.0
        %1279 = vmatpush2.msra.mxu0 0.0
        %1280 = vmatprep.mubr.f32.mxu0 0.0
        %1281 = vmatmul.mubr.f32.gmra.mxu0 %v1214
        %v1282 = vpop.f32.mrf.mxu0
        %v1283 = vadd.f32 0.0, %v1282
        %v1284 = vpop.f32.mrf.mxu0
        %1285 = vdwg.mxu0
        %v1287 = vsel %vm408, %v1283, 0
        %1289 = vmatprep.subr.mxu0 0.0
        %1290 = vmatpush1.msra.mxu0 0.0
        %1291 = vmatprep.subr.mxu0 0.0
        %1292 = vmatpush1.msra.mxu0 0.0
        %1293 = vmatprep.subr.mxu0 0.0
        %1294 = vmatpush1.msra.mxu0 0.0
        %1295 = vmatprep.subr.mxu0 0.0
        %1296 = vmatpush1.msra.mxu0 0.0
        %1297 = vmatprep.subr.mxu0 0.0
        %1298 = vmatpush1.msra.mxu0 0.0
        %1299 = vmatprep.subr.mxu0 0.0
        %1300 = vmatpush1.msra.mxu0 0.0
        %1301 = vmatprep.subr.mxu0 0.0
        %1302 = vmatpush1.msra.mxu0 0.0
        %1303 = vmatprep.subr.mxu0 0.0
        %1304 = vmatpush1.msra.mxu0 0.0
        %1305 = vmatprep.subr.mxu0 0.0
        %1306 = vmatpush1.msra.mxu0 0.0
        %1307 = vmatprep.subr.mxu0 0.0
        %1308 = vmatpush1.msra.mxu0 0.0
        %1309 = vmatprep.subr.mxu0 0.0
        %1310 = vmatpush1.msra.mxu0 0.0
        %1311 = vmatprep.subr.mxu0 0.0
        %1312 = vmatpush1.msra.mxu0 0.0
        %1313 = vmatprep.subr.mxu0 0.0
        %1314 = vmatpush1.msra.mxu0 0.0
        %1315 = vmatprep.subr.mxu0 0.0
        %1316 = vmatpush1.msra.mxu0 0.0
        %1317 = vmatprep.subr.mxu0 0.0
        %1318 = vmatpush1.msra.mxu0 0.0
        %1319 = vmatprep.subr.mxu0 0.0
        %1320 = vmatpush1.msra.mxu0 %v401
        %1321 = vmatprep.subr.mxu0 0.0
        %1322 = vmatpush2.msra.mxu0 0.0
        %1323 = vmatprep.subr.mxu0 0.0
        %1324 = vmatpush2.msra.mxu0 0.0
        %1325 = vmatprep.subr.mxu0 0.0
        %1326 = vmatpush2.msra.mxu0 0.0
        %1327 = vmatprep.subr.mxu0 0.0
        %1328 = vmatpush2.msra.mxu0 0.0
        %1329 = vmatprep.subr.mxu0 0.0
        %1330 = vmatpush2.msra.mxu0 0.0
        %1331 = vmatprep.subr.mxu0 0.0
        %1332 = vmatpush2.msra.mxu0 0.0
        %1333 = vmatprep.subr.mxu0 0.0
        %1334 = vmatpush2.msra.mxu0 0.0
        %1335 = vmatprep.subr.mxu0 0.0
        %1336 = vmatpush2.msra.mxu0 0.0
        %1337 = vmatprep.subr.mxu0 0.0
        %1338 = vmatpush2.msra.mxu0 0.0
        %1339 = vmatprep.subr.mxu0 0.0
        %1340 = vmatpush2.msra.mxu0 0.0
        %1341 = vmatprep.subr.mxu0 0.0
        %1342 = vmatpush2.msra.mxu0 0.0
        %1343 = vmatprep.subr.mxu0 0.0
        %1344 = vmatpush2.msra.mxu0 0.0
        %1345 = vmatprep.subr.mxu0 0.0
        %1346 = vmatpush2.msra.mxu0 0.0
        %1347 = vmatprep.subr.mxu0 0.0
        %1348 = vmatpush2.msra.mxu0 0.0
        %1349 = vmatprep.subr.mxu0 0.0
        %1350 = vmatpush2.msra.mxu0 0.0
        %1351 = vmatprep.subr.mxu0 0.0
        %1352 = vmatpush2.msra.mxu0 0.0
        %1353 = vmatprep.mubr.f32.mxu0 0.0
        %1354 = vmatmul.mubr.f32.gmra.mxu0 %v1287
        %v1355 = vpop.f32.mrf.mxu0
        %v1356 = vadd.f32 0.0, %v1355
        %v1357 = vpop.f32.mrf.mxu0
        %1358 = vdwg.mxu0
        %v1359 = vadd.f32 %v1120, %v1356
        %v1360 = vlaneseq
        %v1361 = vshrl.u32 %v1360, 7
        %v1362 = vsub.s32 0, %v1361
        %v1363 = vrot.slane %v402, %v1362
        %v1364 = vadd.f32 %v1359, %v1363
        %v1365 = vadd.f32 %v311, %v1364
        %v1366 = vsel %vm323, %v1365, 0.0
        %1367 = vadd.xlane.f32.xlu0 %v1366
        %v1368 = vpop.xlane.xlu0 %1367
        %v1369 = vrcp.pop 32.0
        %v1370 = vmul.f32 %v1368, %v1369
        %v1371 = vsub.f32 %v1365, %v1370
        %v1372 = vmul.f32 %v1371, %v1371
        %v1373 = vsel %vm323, %v1372, 0.0
        %1374 = vadd.xlane.f32.xlu0 %v1373
        %v1375 = vpop.xlane.xlu0 %1374
        %v1376 = vmul.f32 %v1375, %v1369
        %v1377 = vadd.f32 %v1376, 1e-05
        %v1378 = vrsqrt.pop %v1377
        %v1379 = vmul.f32 %v1371, %v1378
        %v1380 = vlaneseq
        %v1381 = vshrl.u32 %v1380, 7
        %v1382 = vsub.s32 0, %v1381
        %v1383 = vrot.slane %v403, %v1382
        %v1384 = vmul.f32 %v1379, %v1383
        %v1385 = vlaneseq
        %v1386 = vshrl.u32 %v1385, 7
        %v1387 = vsub.s32 0, %v1386
        %v1388 = vrot.slane %v404, %v1387
        %v1389 = vadd.f32 %v1384, %v1388
        %1390 = vst.msk [vmem:[%s308] sm:$0xff] %vm323, %v1389
        %s1391 = sand.u32 %s164, 1
        %s1392 = scalar_lea.sflag [#allocation4], %s1391
        %s1393 = sand.u32 %s164, 1
        %s1394 = smul.addr %s1393, 8
        %s1395 = scalar_lea.vmem [#allocation10], %s1394
        // Predicated region
        $region61: #{tpu_custom_call.1} parent=43 // pred_check
          %p1396 = pneg %p174
        $region62: #{tpu_custom_call.1} parent=43 // pred_check_branch
          %1398 = sbr.rel (%p1396) target = $region64
        $region63: #{tpu_custom_call.1} parent=43 // pred_region
          %s1400 = ssub.s32 128, 128
          %1401 = vsyncadd %s1392, %s1400
          %s1402 = smul.addr %s25, 128
          %s1403 = scalar_lea.hbm %s6, %s1402
          %s1405 = sshll.u32 %s1395, 4
          %s1406 = int_to_ptr.vmem [resolvable:$true] %s1405
          %1408 = dma.vmem_to_hbm [thread:$0]  %s1406, 128, %s1403, %s1392
        $region64: #{tpu_custom_call.1} parent=43 // pred_fallthru
          _
      $region44: #{tpu_custom_call.1} parent=5 // pred_fallthru
        _
      %p1409 = scmp.le.s32.totalorder 2, %s20
      // Predicated region
      $region65: #{tpu_custom_call.1} parent=5 // pred_check
        %p1410 = pneg %p1409
      $region66: #{tpu_custom_call.1} parent=5 // pred_check_branch
        %1412 = sbr.rel (%p1410) target = $region68
      $region67: #{tpu_custom_call.1} parent=5 // pred_region
        %s1413 = ssub.s32 %s20, 2
        // Predicated region
        $region69: #{tpu_custom_call.1} parent=67 // pred_check
          %p1414 = pneg %p180
        $region70: #{tpu_custom_call.1} parent=67 // pred_check_branch
          %1416 = sbr.rel (%p1414) target = $region72
        $region71: #{tpu_custom_call.1} parent=67 // pred_region
          %s1417 = sand.u32 %s165, 1
          %s1418 = scalar_lea.sflag [#allocation4], %s1417
          %s1419 = sand.u32 %s165, 1
          %s1420 = smul.addr %s1419, 8
          %s1421 = scalar_lea.vmem [#allocation10], %s1420
          %1422 = dma.done %s1418, 128
        $region72: #{tpu_custom_call.1} parent=67 // pred_fallthru
          _
      $region68: #{tpu_custom_call.1} parent=5 // pred_fallthru
        _
    $region6: #{tpu_custom_call.1} parent=1 // loop_footer
      %s24 = sadd.s32 1, %s20
    $region7: #{tpu_custom_call.1} parent=1 // loop_footer_branch
      %19 = sbr.rel target = $region3
    $region8: #{tpu_custom_call.1} parent=1 // loop_exit
      _
    %1423 = vsyncpa [#allocation3], 1
    %s1424 = scalar_lea.sflag [#allocation3], 1
    %1425 = vsyncpa %s1424, 1
    %1426 = vsyncpa [#allocation6], 1
    %1427 = vsyncpa [#allocation9], 1
    %1428 = vsyncpa [#allocation4], 1
    %s1429 = scalar_lea.sflag [#allocation4], 1
    %1430 = vsyncpa %s1429, 1

</llo_original>
